<compile_context>
chip_gen: v7x
topology: tpu7x:2x2x1
jax: 0.10.0
libtpu: 0.0.40
codegen_flags: <defaults>
</compile_context>

<pallas_src>
import jax
import jax.numpy as jnp
from jax.experimental import pallas as pl
from jax.experimental.pallas import tpu as pltpu

LEAKY_SLOPE = 0.01
BN_EPS = 1e-5


# --------------------------------------------------------------------------
# Kernel 1: fused (1x1 + 3x3) conv as a single matmul, + per-channel sum/sumsq
# --------------------------------------------------------------------------
def _fused_conv_stats_kernel(x_ref, wt_ref, y_ref, sum_ref, ssq_ref, xpad_ref):
    n = pl.program_id(0)
    Cin = x_ref.shape[1]
    H = x_ref.shape[2]
    W = x_ref.shape[3]

    @pl.when(n == 0)
    def _init():
        # Zero border persists across grid steps; stats accumulators start at 0.
        xpad_ref[...] = jnp.zeros_like(xpad_ref)
        sum_ref[...] = jnp.zeros_like(sum_ref)
        ssq_ref[...] = jnp.zeros_like(ssq_ref)

    # Place this image in the interior of the (Cin, H+2, W+2) halo scratch.
    xpad_ref[:, 1:H + 1, 1:W + 1] = x_ref[0]

    # im2col slab (9*Cin, H*W): rows grouped by tap (dy, dx), channel-minor,
    # matching the fused weight layout built in the wrapper.
    taps = []
    for dy in range(3):
        for dx in range(3):
            taps.append(xpad_ref[:, dy:dy + H, dx:dx + W].reshape(Cin, H * W))
    slab = jnp.concatenate(taps, axis=0)                       # (9*Cin, H*W)

    # One MXU matmul produces the already-concatenated (C1+C3, H*W) output.
    y = jnp.dot(wt_ref[...], slab, preferred_element_type=jnp.float32)
    y_ref[0] = y

    # One-pass BN statistics: per-channel sum and sum of squares.
    sum_ref[...] += jnp.sum(y, axis=1, keepdims=True)
    ssq_ref[...] += jnp.sum(y * y, axis=1, keepdims=True)


# --------------------------------------------------------------------------
# Kernel 2: per-channel affine (folded BN) + LeakyReLU, lane-dense stores
# --------------------------------------------------------------------------
def _bn_lrelu_kernel(scale_ref, shift_ref, y_ref, o_ref):
    z = y_ref[0] * scale_ref[...] + shift_ref[...]
    o_ref[0] = jnp.where(z >= 0, z, LEAKY_SLOPE * z)


# --------------------------------------------------------------------------
# Wrapper
# --------------------------------------------------------------------------
def _build_fused_weight_t(w1, w3):
    """Fused, transposed weight of shape (C1+C3, 9*Cin).

    Row-group t = dy*3+dx of the K axis holds w3[dy, dx] in the C3 columns;
    the 1x1 weights occupy only the center tap (t == 4) of the C1 columns.
    """
    Cin, C1 = w1.shape
    C3 = w3.shape[3]
    wf = jnp.zeros((9 * Cin, C1 + C3), jnp.float32)
    wf = wf.at[:, C1:].set(w3.reshape(9 * Cin, C3))
    wf = wf.at[4 * Cin:5 * Cin, :C1].set(w1)
    return wf.T


@jax.jit
def simple_block_forward(x_nchw, params):
    """x_nchw: (N, Cin, H, W) float32. Returns (N, C1+C3, H, W) float32."""
    w1, b1, w3, b3, g1, be1, g3, be3 = params
    N, Cin, H, W = x_nchw.shape
    C1 = w1.shape[1]
    C3 = w3.shape[3]
    Cout = C1 + C3
    HW = H * W

    # Conv biases are NOT applied in the kernel: with training-mode BatchNorm
    # they cancel exactly against the batch-mean subtraction.
    del b1, b3

    wt = _build_fused_weight_t(w1, w3)                         # (Cout, 9*Cin)

    y, ysum, ysq = pl.pallas_call(
        _fused_conv_stats_kernel,
        out_shape=(
            jax.ShapeDtypeStruct((N, Cout, HW), jnp.float32),  # pre-BN conv out
            jax.ShapeDtypeStruct((Cout, 1), jnp.float32),      # per-channel sum
            jax.ShapeDtypeStruct((Cout, 1), jnp.float32),      # per-channel sumsq
        ),
        grid_spec=pltpu.PrefetchScalarGridSpec(
            num_scalar_prefetch=0,
            grid=(N,),
            in_specs=[
                pl.BlockSpec((1, Cin, H, W), lambda n: (n, 0, 0, 0)),
                pl.BlockSpec((Cout, 9 * Cin), lambda n: (0, 0)),
            ],
            out_specs=[
                pl.BlockSpec((1, Cout, HW), lambda n: (n, 0, 0)),
                pl.BlockSpec((Cout, 1), lambda n: (0, 0)),
                pl.BlockSpec((Cout, 1), lambda n: (0, 0)),
            ],
            scratch_shapes=[pltpu.VMEM((Cin, H + 2, W + 2), jnp.float32)],
        ),
        compiler_params=pltpu.CompilerParams(
            dimension_semantics=("arbitrary",)),   # stats accumulate across n
    )(x_nchw, wt)

    # Fold BN (training-mode batch stats) into per-channel scale/shift.
    cnt = jnp.float32(N * HW)
    mean = ysum / cnt
    var = ysq / cnt - mean * mean                  # one-pass biased variance
    gamma = jnp.concatenate([g1, g3]).reshape(Cout, 1)
    beta = jnp.concatenate([be1, be3]).reshape(Cout, 1)
    scale = gamma * jax.lax.rsqrt(var + BN_EPS)
    shift = beta - mean * scale

    out = pl.pallas_call(
        _bn_lrelu_kernel,
        out_shape=jax.ShapeDtypeStruct((N, Cout, HW), jnp.float32),
        grid_spec=pltpu.PrefetchScalarGridSpec(
            num_scalar_prefetch=0,
            grid=(N,),
            in_specs=[
                pl.BlockSpec((Cout, 1), lambda n: (0, 0)),
                pl.BlockSpec((Cout, 1), lambda n: (0, 0)),
                pl.BlockSpec((1, Cout, HW), lambda n: (n, 0, 0)),
            ],
            out_specs=pl.BlockSpec((1, Cout, HW), lambda n: (n, 0, 0)),
        ),
        compiler_params=pltpu.CompilerParams(
            dimension_semantics=("parallel",)),    # megacore-shardable on v7x
    )(scale, shift, y)

    # (N, Cout, H*W) is already NCHW; this reshape is pure metadata.
    return out.reshape(N, Cout, H, W)


# --------------------------------------------------------------------------
# Params + pure-JAX reference (mirrors the PyTorch module, biases included)
# --------------------------------------------------------------------------
def init_params(key, in_chan, out_chan_1x1, out_chan_3x3):
    k1, k2, k3, k4 = jax.random.split(key, 4)
    w1 = 0.1 * jax.random.normal(k1, (in_chan, out_chan_1x1), jnp.float32)
    b1 = 0.1 * jax.random.normal(k2, (out_chan_1x1,), jnp.float32)
    w3 = 0.1 * jax.random.normal(k3, (3, 3, in_chan, out_chan_3x3), jnp.float32)
    b3 = 0.1 * jax.random.normal(k4, (out_chan_3x3,), jnp.float32)
    g1 = jnp.ones((out_chan_1x1,), jnp.float32)
    be1 = jnp.zeros((out_chan_1x1,), jnp.float32)
    g3 = jnp.ones((out_chan_3x3,), jnp.float32)
    be3 = jnp.zeros((out_chan_3x3,), jnp.float32)
    return (w1, b1, w3, b3, g1, be1, g3, be3)


def _reference(x_nchw, params):
    w1, b1, w3, b3, g1, be1, g3, be3 = params

    def bn_lrelu(y, gamma, beta):  # y: (N, C, H, W), training-mode batch stats
        mean = jnp.mean(y, axis=(0, 2, 3), keepdims=True)
        var = jnp.mean((y - mean) ** 2, axis=(0, 2, 3), keepdims=True)
        z = (y - mean) / jnp.sqrt(var + BN_EPS)
        z = z * gamma[None, :, None, None] + beta[None, :, None, None]
        return jnp.where(z >= 0, z, LEAKY_SLOPE * z)

    y1 = jnp.einsum('nchw,cd->ndhw', x_nchw, w1) + b1[None, :, None, None]
    w3_oihw = jnp.transpose(w3, (3, 2, 0, 1))
    y3 = jax.lax.conv_general_dilated(
        x_nchw, w3_oihw, window_strides=(1, 1), padding=((1, 1), (1, 1)),
        dimension_numbers=('NCHW', 'OIHW', 'NCHW')) + b3[None, :, None, None]
    return jnp.concatenate([bn_lrelu(y1, g1, be1), bn_lrelu(y3, g3, be3)], axis=1)


if __name__ == "__main__":
    key = jax.random.PRNGKey(0)
    kx, kp = jax.random.split(key)

    N, Cin, H, W = 2, 4, 16, 16
    C1, C3 = 8, 8

    x = jax.random.normal(kx, (N, Cin, H, W), jnp.float32)
    params = init_params(kp, Cin, C1, C3)

    out = jax.block_until_ready(simple_block_forward(x, params))
    ref = jax.block_until_ready(_reference(x, params))

    assert out.shape == (N, C1 + C3, H, W), out.shape
    max_err = float(jnp.max(jnp.abs(out - ref)))
    assert jnp.allclose(out, ref, atol=1e-3, rtol=1e-3), max_err
    print("KERNEL_OK")
</pallas_src>

<mosaic_0001>
module attributes {stable_mosaic.version = 11 : i64} {
  func.func @_bn_lrelu_kernel(%arg0: i32, %arg1: memref<16x1xf32, #tpu.memory_space<vmem>>, %arg2: memref<16x1xf32, #tpu.memory_space<vmem>>, %arg3: memref<1x16x256xf32, #tpu.memory_space<vmem>>, %arg4: memref<1x16x256xf32, #tpu.memory_space<vmem>>) attributes {dimension_semantics = [#tpu.dimension_semantics<parallel>], iteration_bounds = array<i64: 2>, scalar_prefetch = 0 : i64, scratch_operands = 0 : i64, tpu.core_type = #tpu.core_type<tc>, window_params = [{pipeline_mode = #tpu.pipeline_mode<synchronous>, transform_indices = @transform_0, window_bounds = array<i64: 16, 1>}, {pipeline_mode = #tpu.pipeline_mode<synchronous>, transform_indices = @transform_1, window_bounds = array<i64: 16, 1>}, {transform_indices = @transform_2, window_bounds = array<i64: 1, 16, 256>}, {transform_indices = @transform_3, window_bounds = array<i64: 1, 16, 256>}]} {
    %c0 = arith.constant 0 : index
    %c0_0 = arith.constant 0 : index
    %c0_1 = arith.constant 0 : index
    %0 = vector.load %arg3[%c0, %c0_0, %c0_1] : memref<1x16x256xf32, #tpu.memory_space<vmem>>, vector<1x16x256xf32>
    %1 = vector.shape_cast %0 : vector<1x16x256xf32> to vector<16x256xf32>
    %c0_2 = arith.constant 0 : index
    %c0_3 = arith.constant 0 : index
    %2 = vector.load %arg1[%c0_2, %c0_3] : memref<16x1xf32, #tpu.memory_space<vmem>>, vector<16x1xf32>
    %3 = vector.broadcast %2 : vector<16x1xf32> to vector<16x256xf32>
    %4 = arith.mulf %1, %3 : vector<16x256xf32>
    %c0_4 = arith.constant 0 : index
    %c0_5 = arith.constant 0 : index
    %5 = vector.load %arg2[%c0_4, %c0_5] : memref<16x1xf32, #tpu.memory_space<vmem>>, vector<16x1xf32>
    %6 = vector.broadcast %5 : vector<16x1xf32> to vector<16x256xf32>
    %7 = arith.addf %4, %6 : vector<16x256xf32>
    %cst = arith.constant 0.000000e+00 : f32
    %8 = vector.broadcast %cst : f32 to vector<16x256xf32>
    %9 = arith.cmpf oge, %7, %8 : vector<16x256xf32>
    %cst_6 = arith.constant 0.00999999977 : f32
    %10 = vector.broadcast %cst_6 : f32 to vector<16x256xf32>
    %11 = arith.mulf %10, %7 : vector<16x256xf32>
    %12 = arith.select %9, %7, %11 : vector<16x256xi1>, vector<16x256xf32>
    %c0_7 = arith.constant 0 : index
    %c0_8 = arith.constant 0 : index
    %c0_9 = arith.constant 0 : index
    %13 = vector.load %arg4[%c0_7, %c0_8, %c0_9] : memref<1x16x256xf32, #tpu.memory_space<vmem>>, vector<1x16x256xf32>
    %14 = vector.shape_cast %13 : vector<1x16x256xf32> to vector<16x256xf32>
    %15 = vector.shape_cast %12 : vector<16x256xf32> to vector<1x16x256xf32>
    tpu.vector_store %arg4[%c0_7, %c0_8, %c0_9], %15 {strides = array<i32>} : memref<1x16x256xf32, #tpu.memory_space<vmem>>, vector<1x16x256xf32>,
    return
  }
  func.func @transform_0(%arg0: i32) -> (i32, i32) {
    %c0_i32 = arith.constant 0 : i32
    %c0_i32_0 = arith.constant 0 : i32
    %c0_i32_1 = arith.constant 0 : i32
    return %c0_i32, %c0_i32_0 : i32, i32
  }
  func.func @transform_1(%arg0: i32) -> (i32, i32) {
    %c0_i32 = arith.constant 0 : i32
    %c0_i32_0 = arith.constant 0 : i32
    %c0_i32_1 = arith.constant 0 : i32
    return %c0_i32, %c0_i32_0 : i32, i32
  }
  func.func @transform_2(%arg0: i32) -> (i32, i32, i32) {
    %c0_i32 = arith.constant 0 : i32
    %c0_i32_0 = arith.constant 0 : i32
    %c0_i32_1 = arith.constant 0 : i32
    return %arg0, %c0_i32, %c0_i32_0 : i32, i32, i32
  }
  func.func @transform_3(%arg0: i32) -> (i32, i32, i32) {
    %c0_i32 = arith.constant 0 : i32
    %c0_i32_0 = arith.constant 0 : i32
    %c0_i32_1 = arith.constant 0 : i32
    return %arg0, %c0_i32, %c0_i32_0 : i32, i32, i32
  }
}

module attributes {stable_mosaic.version = 11 : i64} {
  func.func @_fused_conv_stats_kernel(%arg0: i32, %arg1: memref<1x4x16x16xf32, #tpu.memory_space<vmem>>, %arg2: memref<16x36xf32, #tpu.memory_space<vmem>>, %arg3: memref<1x16x256xf32, #tpu.memory_space<vmem>>, %arg4: memref<16x1xf32, #tpu.memory_space<vmem>>, %arg5: memref<16x1xf32, #tpu.memory_space<vmem>>, %arg6: memref<4x18x18xf32, #tpu.memory_space<vmem>>) attributes {dimension_semantics = [#tpu.dimension_semantics<arbitrary>], iteration_bounds = array<i64: 2>, scalar_prefetch = 0 : i64, scratch_operands = 1 : i64, tpu.core_type = #tpu.core_type<tc>, window_params = [{transform_indices = @transform_0, window_bounds = array<i64: 1, 4, 16, 16>}, {pipeline_mode = #tpu.pipeline_mode<synchronous>, transform_indices = @transform_1, window_bounds = array<i64: 16, 36>}, {transform_indices = @transform_2, window_bounds = array<i64: 1, 16, 256>}, {pipeline_mode = #tpu.pipeline_mode<synchronous>, transform_indices = @transform_3, window_bounds = array<i64: 16, 1>}, {pipeline_mode = #tpu.pipeline_mode<synchronous>, transform_indices = @transform_4, window_bounds = array<i64: 16, 1>}]} {
    %c0_i32 = arith.constant 0 : i32
    %0 = arith.cmpi eq, %arg0, %c0_i32 : i32
    %1 = arith.extui %0 : i1 to i32
    %c0_i32_0 = arith.constant 0 : i32
    %2 = arith.cmpi ne, %1, %c0_i32_0 : i32
    scf.if %2 {
      %cst_47 = arith.constant 0.000000e+00 : f32
      %41 = vector.broadcast %cst_47 : f32 to vector<4x18x18xf32>
      %c0_48 = arith.constant 0 : index
      %c0_49 = arith.constant 0 : index
      %c0_50 = arith.constant 0 : index
      %42 = vector.load %arg6[%c0_48, %c0_49, %c0_50] : memref<4x18x18xf32, #tpu.memory_space<vmem>>, vector<4x18x18xf32>
      tpu.vector_store %arg6[%c0_48, %c0_49, %c0_50], %41 {strides = array<i32>} : memref<4x18x18xf32, #tpu.memory_space<vmem>>, vector<4x18x18xf32>,
      %cst_51 = arith.constant 0.000000e+00 : f32
      %43 = vector.broadcast %cst_51 : f32 to vector<16x1xf32>
      %c0_52 = arith.constant 0 : index
      %c0_53 = arith.constant 0 : index
      %44 = vector.load %arg4[%c0_52, %c0_53] : memref<16x1xf32, #tpu.memory_space<vmem>>, vector<16x1xf32>
      tpu.vector_store %arg4[%c0_52, %c0_53], %43 {strides = array<i32>} : memref<16x1xf32, #tpu.memory_space<vmem>>, vector<16x1xf32>,
      %cst_54 = arith.constant 0.000000e+00 : f32
      %45 = vector.broadcast %cst_54 : f32 to vector<16x1xf32>
      %c0_55 = arith.constant 0 : index
      %c0_56 = arith.constant 0 : index
      %46 = vector.load %arg5[%c0_55, %c0_56] : memref<16x1xf32, #tpu.memory_space<vmem>>, vector<16x1xf32>
      tpu.vector_store %arg5[%c0_55, %c0_56], %45 {strides = array<i32>} : memref<16x1xf32, #tpu.memory_space<vmem>>, vector<16x1xf32>,
    } else {
    }
    %c0 = arith.constant 0 : index
    %c0_1 = arith.constant 0 : index
    %c0_2 = arith.constant 0 : index
    %c0_3 = arith.constant 0 : index
    %3 = vector.load %arg1[%c0, %c0_1, %c0_2, %c0_3] : memref<1x4x16x16xf32, #tpu.memory_space<vmem>>, vector<1x4x16x16xf32>
    %4 = vector.shape_cast %3 : vector<1x4x16x16xf32> to vector<4x16x16xf32>
    %c0_4 = arith.constant 0 : index
    %c1 = arith.constant 1 : index
    %c1_5 = arith.constant 1 : index
    %5 = vector.load %arg6[%c0_4, %c1, %c1_5] : memref<4x18x18xf32, #tpu.memory_space<vmem>>, vector<4x16x16xf32>
    tpu.vector_store %arg6[%c0_4, %c1, %c1_5], %4 {strides = array<i32>} : memref<4x18x18xf32, #tpu.memory_space<vmem>>, vector<4x16x16xf32>,
    %c0_6 = arith.constant 0 : index
    %c0_7 = arith.constant 0 : index
    %c0_8 = arith.constant 0 : index
    %6 = vector.load %arg6[%c0_6, %c0_7, %c0_8] : memref<4x18x18xf32, #tpu.memory_space<vmem>>, vector<4x16x16xf32>
    %7 = vector.shape_cast %6 : vector<4x16x16xf32> to vector<4x256xf32>
    %c0_9 = arith.constant 0 : index
    %c0_10 = arith.constant 0 : index
    %c1_11 = arith.constant 1 : index
    %8 = vector.load %arg6[%c0_9, %c0_10, %c1_11] : memref<4x18x18xf32, #tpu.memory_space<vmem>>, vector<4x16x16xf32>
    %9 = vector.shape_cast %8 : vector<4x16x16xf32> to vector<4x256xf32>
    %c0_12 = arith.constant 0 : index
    %c0_13 = arith.constant 0 : index
    %c2 = arith.constant 2 : index
    %10 = vector.load %arg6[%c0_12, %c0_13, %c2] : memref<4x18x18xf32, #tpu.memory_space<vmem>>, vector<4x16x16xf32>
    %11 = vector.shape_cast %10 : vector<4x16x16xf32> to vector<4x256xf32>
    %c0_14 = arith.constant 0 : index
    %c1_15 = arith.constant 1 : index
    %c0_16 = arith.constant 0 : index
    %12 = vector.load %arg6[%c0_14, %c1_15, %c0_16] : memref<4x18x18xf32, #tpu.memory_space<vmem>>, vector<4x16x16xf32>
    %13 = vector.shape_cast %12 : vector<4x16x16xf32> to vector<4x256xf32>
    %c0_17 = arith.constant 0 : index
    %c1_18 = arith.constant 1 : index
    %c1_19 = arith.constant 1 : index
    %14 = vector.load %arg6[%c0_17, %c1_18, %c1_19] : memref<4x18x18xf32, #tpu.memory_space<vmem>>, vector<4x16x16xf32>
    %15 = vector.shape_cast %14 : vector<4x16x16xf32> to vector<4x256xf32>
    %c0_20 = arith.constant 0 : index
    %c1_21 = arith.constant 1 : index
    %c2_22 = arith.constant 2 : index
    %16 = vector.load %arg6[%c0_20, %c1_21, %c2_22] : memref<4x18x18xf32, #tpu.memory_space<vmem>>, vector<4x16x16xf32>
    %17 = vector.shape_cast %16 : vector<4x16x16xf32> to vector<4x256xf32>
    %c0_23 = arith.constant 0 : index
    %c2_24 = arith.constant 2 : index
    %c0_25 = arith.constant 0 : index
    %18 = vector.load %arg6[%c0_23, %c2_24, %c0_25] : memref<4x18x18xf32, #tpu.memory_space<vmem>>, vector<4x16x16xf32>
    %19 = vector.shape_cast %18 : vector<4x16x16xf32> to vector<4x256xf32>
    %c0_26 = arith.constant 0 : index
    %c2_27 = arith.constant 2 : index
    %c1_28 = arith.constant 1 : index
    %20 = vector.load %arg6[%c0_26, %c2_27, %c1_28] : memref<4x18x18xf32, #tpu.memory_space<vmem>>, vector<4x16x16xf32>
    %21 = vector.shape_cast %20 : vector<4x16x16xf32> to vector<4x256xf32>
    %c0_29 = arith.constant 0 : index
    %c2_30 = arith.constant 2 : index
    %c2_31 = arith.constant 2 : index
    %22 = vector.load %arg6[%c0_29, %c2_30, %c2_31] : memref<4x18x18xf32, #tpu.memory_space<vmem>>, vector<4x16x16xf32>
    %23 = vector.shape_cast %22 : vector<4x16x16xf32> to vector<4x256xf32>
    %24 = tpu.concatenate %7, %9, %11, %13, %15, %17, %19, %21, %23 in 0 : vector<4x256xf32>, vector<4x256xf32>, vector<4x256xf32>, vector<4x256xf32>, vector<4x256xf32>, vector<4x256xf32>, vector<4x256xf32>, vector<4x256xf32>, vector<4x256xf32> -> vector<36x256xf32>
    %c0_32 = arith.constant 0 : index
    %c0_33 = arith.constant 0 : index
    %25 = vector.load %arg2[%c0_32, %c0_33] : memref<16x36xf32, #tpu.memory_space<vmem>>, vector<16x36xf32>
    %cst = arith.constant dense<0.000000e+00> : vector<16x256xf32>
    %26 = tpu.matmul %25, %24, %cst {dimension_numbers = #tpu.dot_dimension_numbers<[1], [0], [0], [1], [0, 0, 1, 1], [], []>} : vector<16x36xf32>, vector<36x256xf32>, vector<16x256xf32> -> vector<16x256xf32>
    %c0_34 = arith.constant 0 : index
    %c0_35 = arith.constant 0 : index
    %c0_36 = arith.constant 0 : index
    %27 = vector.load %arg3[%c0_34, %c0_35, %c0_36] : memref<1x16x256xf32, #tpu.memory_space<vmem>>, vector<1x16x256xf32>
    %28 = vector.shape_cast %27 : vector<1x16x256xf32> to vector<16x256xf32>
    %29 = vector.shape_cast %26 : vector<16x256xf32> to vector<1x16x256xf32>
    tpu.vector_store %arg3[%c0_34, %c0_35, %c0_36], %29 {strides = array<i32>} : memref<1x16x256xf32, #tpu.memory_space<vmem>>, vector<1x16x256xf32>,
    %c0_37 = arith.constant 0 : index
    %c0_38 = arith.constant 0 : index
    %30 = vector.load %arg4[%c0_37, %c0_38] : memref<16x1xf32, #tpu.memory_space<vmem>>, vector<16x1xf32>
    %cst_39 = arith.constant dense<0.000000e+00> : vector<16xf32>
    %31 = vector.multi_reduction <add>, %26, %cst_39 [1] : vector<16x256xf32> to vector<16xf32>
    %32 = vector.shape_cast %31 : vector<16xf32> to vector<16x1xf32>
    %33 = arith.addf %30, %32 : vector<16x1xf32>
    %c0_40 = arith.constant 0 : index
    %c0_41 = arith.constant 0 : index
    %34 = vector.load %arg4[%c0_40, %c0_41] : memref<16x1xf32, #tpu.memory_space<vmem>>, vector<16x1xf32>
    tpu.vector_store %arg4[%c0_40, %c0_41], %33 {strides = array<i32>} : memref<16x1xf32, #tpu.memory_space<vmem>>, vector<16x1xf32>,
    %c0_42 = arith.constant 0 : index
    %c0_43 = arith.constant 0 : index
    %35 = vector.load %arg5[%c0_42, %c0_43] : memref<16x1xf32, #tpu.memory_space<vmem>>, vector<16x1xf32>
    %36 = arith.mulf %26, %26 : vector<16x256xf32>
    %cst_44 = arith.constant dense<0.000000e+00> : vector<16xf32>
    %37 = vector.multi_reduction <add>, %36, %cst_44 [1] : vector<16x256xf32> to vector<16xf32>
    %38 = vector.shape_cast %37 : vector<16xf32> to vector<16x1xf32>
    %39 = arith.addf %35, %38 : vector<16x1xf32>
    %c0_45 = arith.constant 0 : index
    %c0_46 = arith.constant 0 : index
    %40 = vector.load %arg5[%c0_45, %c0_46] : memref<16x1xf32, #tpu.memory_space<vmem>>, vector<16x1xf32>
    tpu.vector_store %arg5[%c0_45, %c0_46], %39 {strides = array<i32>} : memref<16x1xf32, #tpu.memory_space<vmem>>, vector<16x1xf32>,
    return
  }
  func.func @transform_0(%arg0: i32) -> (i32, i32, i32, i32) {
    %c0_i32 = arith.constant 0 : i32
    %c0_i32_0 = arith.constant 0 : i32
    %c0_i32_1 = arith.constant 0 : i32
    %c0_i32_2 = arith.constant 0 : i32
    return %arg0, %c0_i32, %c0_i32_0, %c0_i32_1 : i32, i32, i32, i32
  }
  func.func @transform_1(%arg0: i32) -> (i32, i32) {
    %c0_i32 = arith.constant 0 : i32
    %c0_i32_0 = arith.constant 0 : i32
    %c0_i32_1 = arith.constant 0 : i32
    return %c0_i32, %c0_i32_0 : i32, i32
  }
  func.func @transform_2(%arg0: i32) -> (i32, i32, i32) {
    %c0_i32 = arith.constant 0 : i32
    %c0_i32_0 = arith.constant 0 : i32
    %c0_i32_1 = arith.constant 0 : i32
    return %arg0, %c0_i32, %c0_i32_0 : i32, i32, i32
  }
  func.func @transform_3(%arg0: i32) -> (i32, i32) {
    %c0_i32 = arith.constant 0 : i32
    %c0_i32_0 = arith.constant 0 : i32
    %c0_i32_1 = arith.constant 0 : i32
    return %c0_i32, %c0_i32_0 : i32, i32
  }
  func.func @transform_4(%arg0: i32) -> (i32, i32) {
    %c0_i32 = arith.constant 0 : i32
    %c0_i32_0 = arith.constant 0 : i32
    %c0_i32_1 = arith.constant 0 : i32
    return %c0_i32, %c0_i32_0 : i32, i32
  }
}

</mosaic_0001>

<llo_original>
// kernel: simple_block_forward.3
$region0: #{simple_block_forward.3}
  #allocation0 [shape = 'u32[]', space=smem, size = 0x4, offset = 0x4, fixed_abs, tag = 'smem constant byte address 0x4 - core index']
  #allocation1 [shape = 'u32[144,128]{1,0:T(1,128)}', space=vmem, size = 0x12000, scoped, tag = 'internal scratch']
  %s0 = inlined_call_operand.vmem [shape: f32[16,1], index: 0, kind: input, shape index: {}]
  %s1 = inlined_call_operand.vmem [shape: f32[16,1], index: 1, kind: input, shape index: {}]
  %s2 = inlined_call_operand.vmem [shape: f32[2,16,256], index: 2, kind: input, shape index: {}]
  %s3 = inlined_call_operand.vmem [shape: f32[2,16,256], index: 3, kind: output, shape index: {}]
  %s4 = sld [smem:[#allocation0]]
  $region45: #{simple_block_forward.3} parent=0
    _
  %s6 = ssub.s32 1, %s4
  %s7 = scalar_select 0, %s6, %s4
  loop: start=0, step=1, limit=4
  $region2: #{simple_block_forward.3} parent=0 // loop_pre_header
    _
  $region3: #{simple_block_forward.3} parent=0 // loop_header
    %s9 = sphi 0, %s13
    %p10 = scmp.ge.s32.totalorder %s9, 4
    %s17 = sphi 0, %s17
    %s19 = sphi 0, %s17
    %s20 = sphi 0, %s19
    %s34 = sphi 0, %s20
    %s38 = sphi 0, %s38
    %s40 = sphi 0, %s38
    %s41 = sphi 0, %s40
    %s55 = sphi 0, %s41
    %s61 = sphi 0, %s63
    %s64 = sphi 0, %s61
    %s65 = sphi 0, %s64
    %s81 = sphi 0, %s65
    %s87 = sphi 0, %s89
    %s90 = sphi 0, %s87
    %s91 = sphi 0, %s90
    %s107 = sphi 0, %s91
  $region4: #{simple_block_forward.3} parent=0 // loop_header_branch
    %12 = sbr.rel (%p10) target = $region8
  $region5: #{simple_block_forward.3} parent=0 // loop_body
    %s14 = ssub.s32 %s9, 1
    %s15 = ssub.s32 %s9, 2
    %s16 = sadd.s32 %s9, 1
    %s18 = sadd.s32 %s17, 1
    %p21 = scmp.eq.s32.totalorder %s9, 1
    %p22 = scmp.ne.s32.totalorder %s17, %s19
    %p23 = scmp.eq.s32.totalorder %s9, 0
    %p24 = por %p22, %p23
    %p25 = scmp.ne.s32.totalorder %s17, %s19
    %p26 = scmp.eq.s32.totalorder %s14, 1
    %p27 = por %p25, %p26
    %p28 = scmp.ne.s32.totalorder %s19, %s20
    %p29 = scmp.eq.s32.totalorder %s14, 0
    %p30 = por %p28, %p29
    %p31 = scmp.ne.s32.totalorder %s19, %s20
    %p32 = scmp.eq.s32.totalorder %s15, 1
    %p33 = por %p31, %p32
    %p35 = scmp.ne.s32.totalorder %s20, %s34
    %p36 = scmp.eq.s32.totalorder %s15, 0
    %p37 = por %p35, %p36
    %s39 = sadd.s32 %s38, 1
    %p42 = scmp.eq.s32.totalorder %s9, 1
    %p43 = scmp.ne.s32.totalorder %s38, %s40
    %p44 = scmp.eq.s32.totalorder %s9, 0
    %p45 = por %p43, %p44
    %p46 = scmp.ne.s32.totalorder %s38, %s40
    %p47 = scmp.eq.s32.totalorder %s14, 1
    %p48 = por %p46, %p47
    %p49 = scmp.ne.s32.totalorder %s40, %s41
    %p50 = scmp.eq.s32.totalorder %s14, 0
    %p51 = por %p49, %p50
    %p52 = scmp.ne.s32.totalorder %s40, %s41
    %p53 = scmp.eq.s32.totalorder %s15, 1
    %p54 = por %p52, %p53
    %p56 = scmp.ne.s32.totalorder %s41, %s55
    %p57 = scmp.eq.s32.totalorder %s15, 0
    %p58 = por %p56, %p57
    %s59 = ssub.s32 %s9, %s16
    %p60 = scmp.eq.s32.totalorder %s59, 0
    %s62 = sadd.s32 %s61, 1
    %s63 = scalar_select %p60, %s61, %s62
    %p66 = pneg %p60
    %p67 = scmp.eq.s32.totalorder %s9, 1
    %p68 = por %p66, %p67
    %p69 = scmp.ne.s32.totalorder %s61, %s64
    %p70 = scmp.eq.s32.totalorder %s9, 0
    %p71 = por %p69, %p70
    %p72 = scmp.ne.s32.totalorder %s61, %s64
    %p73 = scmp.eq.s32.totalorder %s14, 1
    %p74 = por %p72, %p73
    %p75 = scmp.ne.s32.totalorder %s64, %s65
    %p76 = scmp.eq.s32.totalorder %s14, 0
    %p77 = por %p75, %p76
    %p78 = scmp.ne.s32.totalorder %s64, %s65
    %p79 = scmp.eq.s32.totalorder %s15, 1
    %p80 = por %p78, %p79
    %p82 = scmp.ne.s32.totalorder %s65, %s81
    %p83 = scmp.eq.s32.totalorder %s15, 0
    %p84 = por %p82, %p83
    %s85 = ssub.s32 %s9, %s16
    %p86 = scmp.eq.s32.totalorder %s85, 0
    %s88 = sadd.s32 %s87, 1
    %s89 = scalar_select %p86, %s87, %s88
    %p92 = pneg %p86
    %p93 = scmp.eq.s32.totalorder %s9, 1
    %p94 = por %p92, %p93
    %p95 = scmp.ne.s32.totalorder %s87, %s90
    %p96 = scmp.eq.s32.totalorder %s9, 0
    %p97 = por %p95, %p96
    %p98 = scmp.ne.s32.totalorder %s87, %s90
    %p99 = scmp.eq.s32.totalorder %s14, 1
    %p100 = por %p98, %p99
    %p101 = scmp.ne.s32.totalorder %s90, %s91
    %p102 = scmp.eq.s32.totalorder %s14, 0
    %p103 = por %p101, %p102
    %p104 = scmp.ne.s32.totalorder %s90, %s91
    %p105 = scmp.eq.s32.totalorder %s15, 1
    %p106 = por %p104, %p105
    %p108 = scmp.ne.s32.totalorder %s91, %s107
    %p109 = scmp.eq.s32.totalorder %s15, 0
    %p110 = por %p108, %p109
    %p111 = scmp.le.s32.totalorder 1, %s9
    %p112 = scmp.lt.s32.totalorder %s9, 3
    %p113 = pnand %p111, %p112
    %p114 = pneg %p113
    // Predicated region
    $region9: #{simple_block_forward.3} parent=5 // pred_check
      _
    $region10: #{simple_block_forward.3} parent=5 // pred_check_branch
      %116 = sbr.rel (%p113) target = $region12
    $region11: #{simple_block_forward.3} parent=5 // pred_region
      %s117 = ssub.s32 %s9, 1
      // Predicated region
      $region13: #{simple_block_forward.3} parent=11 // pred_check
        %p118 = pneg %p30
      $region14: #{simple_block_forward.3} parent=11 // pred_check_branch
        %120 = sbr.rel (%p118) target = $region16
      $region15: #{simple_block_forward.3} parent=11 // pred_region
        _
      $region16: #{simple_block_forward.3} parent=11 // pred_fallthru
        _
      // Predicated region
      $region17: #{simple_block_forward.3} parent=11 // pred_check
        %p121 = pneg %p51
      $region18: #{simple_block_forward.3} parent=11 // pred_check_branch
        %123 = sbr.rel (%p121) target = $region20
      $region19: #{simple_block_forward.3} parent=11 // pred_region
        _
      $region20: #{simple_block_forward.3} parent=11 // pred_fallthru
        _
    $region12: #{simple_block_forward.3} parent=5 // pred_fallthru
      _
    %p124 = scmp.lt.s32.totalorder %s9, 2
    // Predicated region
    $region21: #{simple_block_forward.3} parent=5 // pred_check
      %p125 = pneg %p124
    $region22: #{simple_block_forward.3} parent=5 // pred_check_branch
      %127 = sbr.rel (%p125) target = $region24
    $region23: #{simple_block_forward.3} parent=5 // pred_region
      // Predicated region
      $region25: #{simple_block_forward.3} parent=23 // pred_check
        %p128 = pneg %p71
      $region26: #{simple_block_forward.3} parent=23 // pred_check_branch
        %130 = sbr.rel (%p128) target = $region28
      $region27: #{simple_block_forward.3} parent=23 // pred_region
        %p131 = scmp.lt.s32.totalorder %s9, 1
        %s132 = scalar_select %p131, %s9, 1
        %s133 = smul.addr %s132, 4
        %s134 = smul.addr %s133, 8
        %s135 = scalar_lea.vmem %s2, %s134
      $region28: #{simple_block_forward.3} parent=23 // pred_fallthru
        _
    $region24: #{simple_block_forward.3} parent=5 // pred_fallthru
      _
    %p136 = scmp.le.s32.totalorder 1, %s9
    %p137 = scmp.lt.s32.totalorder %s9, 3
    %p138 = pnand %p136, %p137
    %p139 = pneg %p138
    // Predicated region
    $region29: #{simple_block_forward.3} parent=5 // pred_check
      _
    $region30: #{simple_block_forward.3} parent=5 // pred_check_branch
      %141 = sbr.rel (%p138) target = $region32
    $region31: #{simple_block_forward.3} parent=5 // pred_region
      %s142 = ssub.s32 %s9, 1
      %p143 = pneg %p30
      %p144 = pneg %p27
      %p145 = pneg %p51
      %p146 = pneg %p48
      %p147 = scmp.lt.s32.totalorder %s14, 1
      %s148 = scalar_select %p147, %s14, 1
      %s149 = smul.addr %s148, 4
      %s150 = smul.addr %s149, 8
      %s151 = scalar_lea.vmem %s2, %s150
      %p152 = pneg %p77
      %p153 = pneg %p74
      %p154 = pneg %p103
      %p155 = pneg %p100
      %p156 = scmp.lt.s32.totalorder %s14, 1
      %s157 = scalar_select %p156, %s14, 1
      %s158 = smul.addr %s157, 4
      %s159 = smul.addr %s158, 8
      %s160 = scalar_lea.vmem %s3, %s159
      %p161 = scmp.lt.s32.totalorder %s14, 1
      %s162 = scalar_select %p161, %s14, 1
      %s163 = smul.addr %s162, 4
      %s164 = smul.addr %s163, 8
      %s165 = scalar_lea.vmem %s2, %s164
      %p166 = scmp.lt.s32.totalorder %s14, 1
      %s167 = scalar_select %p166, %s14, 1
      %s168 = smul.addr %s167, 4
      %s169 = smul.addr %s168, 8
      %s170 = scalar_lea.vmem %s3, %s169
      %v171 = vld [vmem:[%s165] sm:$0xff]
      %v172 = vld [vmem:[%s165 + $0x8] sm:$0xff]
      %v173 = vld [vmem:[%s165 + $0x10] sm:$0xff]
      %v174 = vld [vmem:[%s165 + $0x18] sm:$0xff]
      %v175 = vld [vmem:[%s0] sm:$0xff]
      %v176 = vld [vmem:[%s0 + $0x8] sm:$0xff]
      %178 = vset.pattern.permute.xlu0 0
      %179 = vperm.xlu0 %178, %v175
      %v180 = vpop.permute.xlu0 %179
      %183 = vset.pattern.permute.xlu0 0
      %184 = vperm.xlu0 %183, %v176
      %v185 = vpop.permute.xlu0 %184
      %v187 = vmul.f32 %v171, %v180
      %v188 = vmul.f32 %v172, %v180
      %v189 = vmul.f32 %v173, %v185
      %v190 = vmul.f32 %v174, %v185
      %v191 = vld [vmem:[%s1] sm:$0xff]
      %v192 = vld [vmem:[%s1 + $0x8] sm:$0xff]
      %194 = vset.pattern.permute.xlu0 0
      %195 = vperm.xlu0 %194, %v191
      %v196 = vpop.permute.xlu0 %195
      %199 = vset.pattern.permute.xlu0 0
      %200 = vperm.xlu0 %199, %v192
      %v201 = vpop.permute.xlu0 %200
      %v203 = vadd.f32 %v187, %v196
      %v204 = vadd.f32 %v188, %v196
      %v205 = vadd.f32 %v189, %v201
      %v206 = vadd.f32 %v190, %v201
      %vm207 = vcmp.ge.f32.partialorder %v203, 0.0
      %vm208 = vcmp.ge.f32.partialorder %v204, 0.0
      %vm209 = vcmp.ge.f32.partialorder %v205, 0.0
      %vm210 = vcmp.ge.f32.partialorder %v206, 0.0
      %v211 = vmul.f32 %v203, 0.01
      %v212 = vmul.f32 %v204, 0.01
      %v213 = vmul.f32 %v205, 0.01
      %v214 = vmul.f32 %v206, 0.01
      %v215 = vsel %vm207, %v203, %v211
      %v216 = vsel %vm208, %v204, %v212
      %v217 = vsel %vm209, %v205, %v213
      %v218 = vsel %vm210, %v206, %v214
      %219 = vst [vmem:[%s170] sm:$0xff] %v215
      %220 = vst [vmem:[%s170 + $0x8] sm:$0xff] %v216
      %221 = vst [vmem:[%s170 + $0x10] sm:$0xff] %v217
      %222 = vst [vmem:[%s170 + $0x18] sm:$0xff] %v218
      %p223 = scmp.lt.s32.totalorder %s14, 1
      %s224 = scalar_select %p223, %s14, 1
      %s225 = smul.addr %s224, 4
      %s226 = smul.addr %s225, 8
      %s227 = scalar_lea.vmem %s3, %s226
      // Predicated region
      $region33: #{simple_block_forward.3} parent=31 // pred_check
        %p228 = pneg %p100
      $region34: #{simple_block_forward.3} parent=31 // pred_check_branch
        %230 = sbr.rel (%p228) target = $region36
      $region35: #{simple_block_forward.3} parent=31 // pred_region
        _
      $region36: #{simple_block_forward.3} parent=31 // pred_fallthru
        _
    $region32: #{simple_block_forward.3} parent=5 // pred_fallthru
      _
    %p231 = scmp.le.s32.totalorder 2, %s9
    // Predicated region
    $region37: #{simple_block_forward.3} parent=5 // pred_check
      %p232 = pneg %p231
    $region38: #{simple_block_forward.3} parent=5 // pred_check_branch
      %234 = sbr.rel (%p232) target = $region40
    $region39: #{simple_block_forward.3} parent=5 // pred_region
      %s235 = ssub.s32 %s9, 2
      // Predicated region
      $region41: #{simple_block_forward.3} parent=39 // pred_check
        %p236 = pneg %p106
      $region42: #{simple_block_forward.3} parent=39 // pred_check_branch
        %238 = sbr.rel (%p236) target = $region44
      $region43: #{simple_block_forward.3} parent=39 // pred_region
        %p239 = scmp.lt.s32.totalorder %s15, 1
        %s240 = scalar_select %p239, %s15, 1
        %s241 = smul.addr %s240, 4
        %s242 = smul.addr %s241, 8
        %s243 = scalar_lea.vmem %s3, %s242
      $region44: #{simple_block_forward.3} parent=39 // pred_fallthru
        _
    $region40: #{simple_block_forward.3} parent=5 // pred_fallthru
      _
  $region6: #{simple_block_forward.3} parent=0 // loop_footer
    %s13 = sadd.s32 1, %s9
  $region7: #{simple_block_forward.3} parent=0 // loop_footer_branch
    %8 = sbr.rel target = $region3
  $region8: #{simple_block_forward.3} parent=0 // loop_exit
    _

// kernel: simple_block_forward.2
$region0: #{simple_block_forward.2}
  #allocation0 [shape = 'u32[]', space=smem, size = 0x4, offset = 0x4, fixed_abs, tag = 'smem constant byte address 0x4 - core index']
  #allocation1 [shape = 'u32[144,128]{1,0:T(1,128)}', space=vmem, size = 0x12000, scoped, tag = 'internal scratch']
  #allocation2 [shape = 'f32[4,18,18]{2,1,0:T(8,128)}', space=vmem, size = 0xc000, scoped, tag = 'scratch operand']
  %s0 = inlined_call_operand.vmem [shape: f32[2,4,16,16], index: 0, kind: input, shape index: {}]
  %s1 = inlined_call_operand.vmem [shape: f32[16,36], index: 1, kind: input, shape index: {}]
  %s2 = inlined_call_operand.vmem [shape: f32[2,16,256], index: 2, kind: output, shape index: {0}]
  %s3 = inlined_call_operand.vmem [shape: f32[16,1], index: 3, kind: output, shape index: {1}]
  %s4 = inlined_call_operand.vmem [shape: f32[16,1], index: 4, kind: output, shape index: {2}]
  %5 = xla_tuple %s2, %s3, %s4
  %s6 = sld [smem:[#allocation0]]
  $region61: #{simple_block_forward.2} parent=0
    _
  %s8 = ssub.s32 1, %s6
  %s9 = scalar_select 0, %s8, %s6
  loop: start=0, step=1, limit=4
  $region2: #{simple_block_forward.2} parent=0 // loop_pre_header
    _
  $region3: #{simple_block_forward.2} parent=0 // loop_header
    %s11 = sphi 0, %s15
    %p12 = scmp.ge.s32.totalorder %s11, 4
    %s21 = sphi 0, %s23
    %s24 = sphi 0, %s21
    %s25 = sphi 0, %s24
    %s41 = sphi 0, %s25
    %s45 = sphi 0, %s45
    %s47 = sphi 0, %s45
    %s48 = sphi 0, %s47
    %s62 = sphi 0, %s48
    %s68 = sphi 0, %s70
    %s71 = sphi 0, %s68
    %s72 = sphi 0, %s71
    %s88 = sphi 0, %s72
    %s92 = sphi 0, %s92
    %s94 = sphi 0, %s92
    %s95 = sphi 0, %s94
    %s109 = sphi 0, %s95
    %s113 = sphi 0, %s113
    %s115 = sphi 0, %s113
    %s116 = sphi 0, %s115
    %s130 = sphi 0, %s116
  $region4: #{simple_block_forward.2} parent=0 // loop_header_branch
    %14 = sbr.rel (%p12) target = $region8
  $region5: #{simple_block_forward.2} parent=0 // loop_body
    %s16 = ssub.s32 %s11, 1
    %s17 = ssub.s32 %s11, 2
    %s18 = sadd.s32 %s11, 1
    %s19 = ssub.s32 %s11, %s18
    %p20 = scmp.eq.s32.totalorder %s19, 0
    %s22 = sadd.s32 %s21, 1
    %s23 = scalar_select %p20, %s21, %s22
    %p26 = pneg %p20
    %p27 = scmp.eq.s32.totalorder %s11, 1
    %p28 = por %p26, %p27
    %p29 = scmp.ne.s32.totalorder %s21, %s24
    %p30 = scmp.eq.s32.totalorder %s11, 0
    %p31 = por %p29, %p30
    %p32 = scmp.ne.s32.totalorder %s21, %s24
    %p33 = scmp.eq.s32.totalorder %s16, 1
    %p34 = por %p32, %p33
    %p35 = scmp.ne.s32.totalorder %s24, %s25
    %p36 = scmp.eq.s32.totalorder %s16, 0
    %p37 = por %p35, %p36
    %p38 = scmp.ne.s32.totalorder %s24, %s25
    %p39 = scmp.eq.s32.totalorder %s17, 1
    %p40 = por %p38, %p39
    %p42 = scmp.ne.s32.totalorder %s25, %s41
    %p43 = scmp.eq.s32.totalorder %s17, 0
    %p44 = por %p42, %p43
    %s46 = sadd.s32 %s45, 1
    %p49 = scmp.eq.s32.totalorder %s11, 1
    %p50 = scmp.ne.s32.totalorder %s45, %s47
    %p51 = scmp.eq.s32.totalorder %s11, 0
    %p52 = por %p50, %p51
    %p53 = scmp.ne.s32.totalorder %s45, %s47
    %p54 = scmp.eq.s32.totalorder %s16, 1
    %p55 = por %p53, %p54
    %p56 = scmp.ne.s32.totalorder %s47, %s48
    %p57 = scmp.eq.s32.totalorder %s16, 0
    %p58 = por %p56, %p57
    %p59 = scmp.ne.s32.totalorder %s47, %s48
    %p60 = scmp.eq.s32.totalorder %s17, 1
    %p61 = por %p59, %p60
    %p63 = scmp.ne.s32.totalorder %s48, %s62
    %p64 = scmp.eq.s32.totalorder %s17, 0
    %p65 = por %p63, %p64
    %s66 = ssub.s32 %s11, %s18
    %p67 = scmp.eq.s32.totalorder %s66, 0
    %s69 = sadd.s32 %s68, 1
    %s70 = scalar_select %p67, %s68, %s69
    %p73 = pneg %p67
    %p74 = scmp.eq.s32.totalorder %s11, 1
    %p75 = por %p73, %p74
    %p76 = scmp.ne.s32.totalorder %s68, %s71
    %p77 = scmp.eq.s32.totalorder %s11, 0
    %p78 = por %p76, %p77
    %p79 = scmp.ne.s32.totalorder %s68, %s71
    %p80 = scmp.eq.s32.totalorder %s16, 1
    %p81 = por %p79, %p80
    %p82 = scmp.ne.s32.totalorder %s71, %s72
    %p83 = scmp.eq.s32.totalorder %s16, 0
    %p84 = por %p82, %p83
    %p85 = scmp.ne.s32.totalorder %s71, %s72
    %p86 = scmp.eq.s32.totalorder %s17, 1
    %p87 = por %p85, %p86
    %p89 = scmp.ne.s32.totalorder %s72, %s88
    %p90 = scmp.eq.s32.totalorder %s17, 0
    %p91 = por %p89, %p90
    %s93 = sadd.s32 %s92, 1
    %p96 = scmp.eq.s32.totalorder %s11, 1
    %p97 = scmp.ne.s32.totalorder %s92, %s94
    %p98 = scmp.eq.s32.totalorder %s11, 0
    %p99 = por %p97, %p98
    %p100 = scmp.ne.s32.totalorder %s92, %s94
    %p101 = scmp.eq.s32.totalorder %s16, 1
    %p102 = por %p100, %p101
    %p103 = scmp.ne.s32.totalorder %s94, %s95
    %p104 = scmp.eq.s32.totalorder %s16, 0
    %p105 = por %p103, %p104
    %p106 = scmp.ne.s32.totalorder %s94, %s95
    %p107 = scmp.eq.s32.totalorder %s17, 1
    %p108 = por %p106, %p107
    %p110 = scmp.ne.s32.totalorder %s95, %s109
    %p111 = scmp.eq.s32.totalorder %s17, 0
    %p112 = por %p110, %p111
    %s114 = sadd.s32 %s113, 1
    %p117 = scmp.eq.s32.totalorder %s11, 1
    %p118 = scmp.ne.s32.totalorder %s113, %s115
    %p119 = scmp.eq.s32.totalorder %s11, 0
    %p120 = por %p118, %p119
    %p121 = scmp.ne.s32.totalorder %s113, %s115
    %p122 = scmp.eq.s32.totalorder %s16, 1
    %p123 = por %p121, %p122
    %p124 = scmp.ne.s32.totalorder %s115, %s116
    %p125 = scmp.eq.s32.totalorder %s16, 0
    %p126 = por %p124, %p125
    %p127 = scmp.ne.s32.totalorder %s115, %s116
    %p128 = scmp.eq.s32.totalorder %s17, 1
    %p129 = por %p127, %p128
    %p131 = scmp.ne.s32.totalorder %s116, %s130
    %p132 = scmp.eq.s32.totalorder %s17, 0
    %p133 = por %p131, %p132
    %p134 = scmp.le.s32.totalorder 1, %s11
    %p135 = scmp.lt.s32.totalorder %s11, 3
    %p136 = pnand %p134, %p135
    %p137 = pneg %p136
    // Predicated region
    $region9: #{simple_block_forward.2} parent=5 // pred_check
      _
    $region10: #{simple_block_forward.2} parent=5 // pred_check_branch
      %139 = sbr.rel (%p136) target = $region12
    $region11: #{simple_block_forward.2} parent=5 // pred_region
      %s140 = ssub.s32 %s11, 1
      // Predicated region
      $region13: #{simple_block_forward.2} parent=11 // pred_check
        %p141 = pneg %p58
      $region14: #{simple_block_forward.2} parent=11 // pred_check_branch
        %143 = sbr.rel (%p141) target = $region16
      $region15: #{simple_block_forward.2} parent=11 // pred_region
        _
      $region16: #{simple_block_forward.2} parent=11 // pred_fallthru
        _
    $region12: #{simple_block_forward.2} parent=5 // pred_fallthru
      _
    %p144 = scmp.lt.s32.totalorder %s11, 2
    // Predicated region
    $region17: #{simple_block_forward.2} parent=5 // pred_check
      %p145 = pneg %p144
    $region18: #{simple_block_forward.2} parent=5 // pred_check_branch
      %147 = sbr.rel (%p145) target = $region20
    $region19: #{simple_block_forward.2} parent=5 // pred_region
      // Predicated region
      $region21: #{simple_block_forward.2} parent=19 // pred_check
        %p148 = pneg %p31
      $region22: #{simple_block_forward.2} parent=19 // pred_check_branch
        %150 = sbr.rel (%p148) target = $region24
      $region23: #{simple_block_forward.2} parent=19 // pred_region
        %p151 = scmp.lt.s32.totalorder %s11, 1
        %s152 = scalar_select %p151, %s11, 1
        %s153 = smul.addr %s152, 8
        %s154 = smul.addr %s153, 8
        %s155 = scalar_lea.vmem %s0, %s154
      $region24: #{simple_block_forward.2} parent=19 // pred_fallthru
        _
    $region20: #{simple_block_forward.2} parent=5 // pred_fallthru
      _
    %p156 = scmp.le.s32.totalorder 1, %s11
    %p157 = scmp.lt.s32.totalorder %s11, 3
    %p158 = pnand %p156, %p157
    %p159 = pneg %p158
    // Predicated region
    $region25: #{simple_block_forward.2} parent=5 // pred_check
      _
    $region26: #{simple_block_forward.2} parent=5 // pred_check_branch
      %161 = sbr.rel (%p158) target = $region28
    $region27: #{simple_block_forward.2} parent=5 // pred_region
      %s162 = ssub.s32 %s11, 1
      %p163 = scmp.lt.s32.totalorder %s16, 1
      %s164 = scalar_select %p163, %s16, 1
      %s165 = smul.addr %s164, 8
      %s166 = smul.addr %s165, 8
      %s167 = scalar_lea.vmem %s0, %s166
      %p168 = pneg %p37
      %p169 = pneg %p34
      %p170 = pneg %p58
      %p171 = pneg %p55
      %p172 = pneg %p84
      %p173 = pneg %p81
      %p174 = scmp.lt.s32.totalorder %s16, 1
      %s175 = scalar_select %p174, %s16, 1
      %s176 = smul.addr %s175, 4
      %s177 = smul.addr %s176, 8
      %s178 = scalar_lea.vmem %s2, %s177
      %p179 = pneg %p105
      %p180 = pneg %p102
      %p181 = pneg %p126
      %p182 = pneg %p123
      %p183 = scmp.lt.s32.totalorder %s16, 1
      %s184 = scalar_select %p183, %s16, 1
      %s185 = smul.addr %s184, 8
      %s186 = smul.addr %s185, 8
      %s187 = scalar_lea.vmem %s0, %s186
      %p188 = scmp.lt.s32.totalorder %s16, 1
      %s189 = scalar_select %p188, %s16, 1
      %s190 = smul.addr %s189, 4
      %s191 = smul.addr %s190, 8
      %s192 = scalar_lea.vmem %s2, %s191
      %p193 = scmp.eq.s32.totalorder %s16, 0
      // Predicated region
      $region29: #{simple_block_forward.2} parent=27 // pred_check
        %p194 = pneg %p193
      $region30: #{simple_block_forward.2} parent=27 // pred_check_branch
        %196 = sbr.rel (%p194) target = $region32
      $region31: #{simple_block_forward.2} parent=27 // pred_region
        %vm197 = vcmask 146432
        %198 = vst.msk [vmem:[#allocation2] sm:$0xff] %vm197, 0.0
        %199 = vst.msk [vmem:[#allocation2 + $0x8] sm:$0xff] %vm197, 0.0
        %vm200 = vcmask 140288
        %201 = vst.msk [vmem:[#allocation2 + $0x10] sm:$0x3] %vm200, 0.0
        %202 = vst.msk [vmem:[#allocation2 + $0x18] sm:$0xff] %vm197, 0.0
        %203 = vst.msk [vmem:[#allocation2 + $0x20] sm:$0xff] %vm197, 0.0
        %204 = vst.msk [vmem:[#allocation2 + $0x28] sm:$0x3] %vm200, 0.0
        %205 = vst.msk [vmem:[#allocation2 + $0x30] sm:$0xff] %vm197, 0.0
        %206 = vst.msk [vmem:[#allocation2 + $0x38] sm:$0xff] %vm197, 0.0
        %207 = vst.msk [vmem:[#allocation2 + $0x40] sm:$0x3] %vm200, 0.0
        %208 = vst.msk [vmem:[#allocation2 + $0x48] sm:$0xff] %vm197, 0.0
        %209 = vst.msk [vmem:[#allocation2 + $0x50] sm:$0xff] %vm197, 0.0
        %210 = vst.msk [vmem:[#allocation2 + $0x58] sm:$0x3] %vm200, 0.0
        %vm211 = vcmask 7168
        %212 = vst.msk [vmem:[%s3] sm:$0xff] %vm211, 0.0
        %213 = vst.msk [vmem:[%s3 + $0x8] sm:$0xff] %vm211, 0.0
        %214 = vst.msk [vmem:[%s4] sm:$0xff] %vm211, 0.0
        %215 = vst.msk [vmem:[%s4 + $0x8] sm:$0xff] %vm211, 0.0
      $region32: #{simple_block_forward.2} parent=27 // pred_fallthru
        _
      %v216 = vld [vmem:[%s187] sm:$0xff]
      %v217 = vld [vmem:[%s187 + $0x8] sm:$0xff]
      %v218 = vld [vmem:[%s187 + $0x10] sm:$0xff]
      %v219 = vld [vmem:[%s187 + $0x18] sm:$0xff]
      %v220 = vld [vmem:[%s187 + $0x20] sm:$0xff]
      %v221 = vld [vmem:[%s187 + $0x28] sm:$0xff]
      %v222 = vld [vmem:[%s187 + $0x30] sm:$0xff]
      %v223 = vld [vmem:[%s187 + $0x38] sm:$0xff]
      %232 = vrot.lane.b32.xlu0 %v216, 1
      %v233 = vpop.permute.xlu0 %232
      %234 = vrot.lane.b32.xlu0 %v217, 1
      %v235 = vpop.permute.xlu0 %234
      %236 = vrot.lane.b32.xlu0 %v218, 1
      %v237 = vpop.permute.xlu0 %236
      %238 = vrot.lane.b32.xlu0 %v219, 1
      %v239 = vpop.permute.xlu0 %238
      %240 = vrot.lane.b32.xlu0 %v220, 1
      %v241 = vpop.permute.xlu0 %240
      %242 = vrot.lane.b32.xlu0 %v221, 1
      %v243 = vpop.permute.xlu0 %242
      %244 = vrot.lane.b32.xlu0 %v222, 1
      %v245 = vpop.permute.xlu0 %244
      %246 = vrot.lane.b32.xlu0 %v223, 1
      %v247 = vpop.permute.xlu0 %246
      %vm256 = vcmask 138248
      %257 = vst.msk [vmem:[#allocation2 + $0x1] sm:$0xff] %vm256, %v233
      %258 = vst.msk [vmem:[#allocation2 + $0x9] sm:$0xff] %vm256, %v235
      %259 = vst.msk [vmem:[#allocation2 + $0x19] sm:$0xff] %vm256, %v237
      %260 = vst.msk [vmem:[#allocation2 + $0x21] sm:$0xff] %vm256, %v239
      %261 = vst.msk [vmem:[#allocation2 + $0x31] sm:$0xff] %vm256, %v241
      %262 = vst.msk [vmem:[#allocation2 + $0x39] sm:$0xff] %vm256, %v243
      %263 = vst.msk [vmem:[#allocation2 + $0x49] sm:$0xff] %vm256, %v245
      %264 = vst.msk [vmem:[#allocation2 + $0x51] sm:$0xff] %vm256, %v247
      %v265 = vld [vmem:[#allocation2] sm:$0xff]
      %v266 = vld [vmem:[#allocation2 + $0x8] sm:$0xff]
      %v267 = vld [vmem:[#allocation2 + $0x18] sm:$0xff]
      %v268 = vld [vmem:[#allocation2 + $0x20] sm:$0xff]
      %v269 = vld [vmem:[#allocation2 + $0x30] sm:$0xff]
      %v270 = vld [vmem:[#allocation2 + $0x38] sm:$0xff]
      %v271 = vld [vmem:[#allocation2 + $0x48] sm:$0xff]
      %v272 = vld [vmem:[#allocation2 + $0x50] sm:$0xff]
      %v273 = vcombine.low %v265, %v269
      %v274 = vcombine.high %v265, %v269
      %v276 = vunpack.c.l.s4 1983009808
      %v277 = vunpack.c.0.s8 %v276
      %v278 = vlaneseq
      %v279 = vshrl.u32 %v278, 7
      %v280 = vsub.s32 %v277, %v279
      %v281 = vrot.slane %v273, %v280
      %v283 = vunpack.c.l.s4 1983009808
      %v284 = vunpack.c.0.s8 %v283
      %v285 = vlaneseq
      %v286 = vshrl.u32 %v285, 7
      %v287 = vsub.s32 %v284, %v286
      %v288 = vrot.slane %v274, %v287
      %v289 = vcombine.low %v267, %v271
      %v290 = vcombine.high %v267, %v271
      %v292 = vunpack.c.l.s4 1983009808
      %v293 = vunpack.c.0.s8 %v292
      %v294 = vlaneseq
      %v295 = vshrl.u32 %v294, 7
      %v296 = vsub.s32 %v293, %v295
      %v297 = vrot.slane %v289, %v296
      %v299 = vunpack.c.l.s4 1983009808
      %v300 = vunpack.c.0.s8 %v299
      %v301 = vlaneseq
      %v302 = vshrl.u32 %v301, 7
      %v303 = vsub.s32 %v300, %v302
      %v304 = vrot.slane %v290, %v303
      %v305 = vcombine.low %v281, %v297
      %v306 = vcombine.high %v281, %v297
      %v308 = vunpack.c.l.s4 1934713408
      %v309 = vunpack.c.0.s8 %v308
      %v310 = vlaneseq
      %v311 = vshrl.u32 %v310, 7
      %v312 = vsub.s32 %v309, %v311
      %v313 = vrot.slane %v305, %v312
      %v315 = vunpack.c.l.s4 1934713408
      %v316 = vunpack.c.0.s8 %v315
      %v317 = vlaneseq
      %v318 = vshrl.u32 %v317, 7
      %v319 = vsub.s32 %v316, %v318
      %v320 = vrot.slane %v306, %v319
      %v321 = vcombine.low %v288, %v304
      %v322 = vcombine.high %v288, %v304
      %v324 = vunpack.c.l.s4 1934713408
      %v325 = vunpack.c.0.s8 %v324
      %v326 = vlaneseq
      %v327 = vshrl.u32 %v326, 7
      %v328 = vsub.s32 %v325, %v327
      %v329 = vrot.slane %v321, %v328
      %v331 = vunpack.c.l.s4 1934713408
      %v332 = vunpack.c.0.s8 %v331
      %v333 = vlaneseq
      %v334 = vshrl.u32 %v333, 7
      %v335 = vsub.s32 %v332, %v334
      %v336 = vrot.slane %v322, %v335
      %v337 = vcombine.high %v313, 0.0
      %v338 = vcombine.high %v320, 0.0
      %v339 = vcombine.high %v329, 0.0
      %v340 = vcombine.high %v336, 0.0
      %v341 = vcombine.low %v266, %v270
      %v342 = vcombine.high %v266, %v270
      %v344 = vunpack.c.l.s4 1983009808
      %v345 = vunpack.c.0.s8 %v344
      %v346 = vlaneseq
      %v347 = vshrl.u32 %v346, 7
      %v348 = vsub.s32 %v345, %v347
      %v349 = vrot.slane %v341, %v348
      %v351 = vunpack.c.l.s4 1983009808
      %v352 = vunpack.c.0.s8 %v351
      %v353 = vlaneseq
      %v354 = vshrl.u32 %v353, 7
      %v355 = vsub.s32 %v352, %v354
      %v356 = vrot.slane %v342, %v355
      %v357 = vcombine.low %v268, %v272
      %v358 = vcombine.high %v268, %v272
      %v360 = vunpack.c.l.s4 1983009808
      %v361 = vunpack.c.0.s8 %v360
      %v362 = vlaneseq
      %v363 = vshrl.u32 %v362, 7
      %v364 = vsub.s32 %v361, %v363
      %v365 = vrot.slane %v357, %v364
      %v367 = vunpack.c.l.s4 1983009808
      %v368 = vunpack.c.0.s8 %v367
      %v369 = vlaneseq
      %v370 = vshrl.u32 %v369, 7
      %v371 = vsub.s32 %v368, %v370
      %v372 = vrot.slane %v358, %v371
      %v373 = vcombine.low %v349, %v365
      %v374 = vcombine.high %v349, %v365
      %v376 = vunpack.c.l.s4 1934713408
      %v377 = vunpack.c.0.s8 %v376
      %v378 = vlaneseq
      %v379 = vshrl.u32 %v378, 7
      %v380 = vsub.s32 %v377, %v379
      %v381 = vrot.slane %v373, %v380
      %v383 = vunpack.c.l.s4 1934713408
      %v384 = vunpack.c.0.s8 %v383
      %v385 = vlaneseq
      %v386 = vshrl.u32 %v385, 7
      %v387 = vsub.s32 %v384, %v386
      %v388 = vrot.slane %v374, %v387
      %v389 = vcombine.low %v356, %v372
      %v390 = vcombine.high %v356, %v372
      %v392 = vunpack.c.l.s4 1934713408
      %v393 = vunpack.c.0.s8 %v392
      %v394 = vlaneseq
      %v395 = vshrl.u32 %v394, 7
      %v396 = vsub.s32 %v393, %v395
      %v397 = vrot.slane %v389, %v396
      %v399 = vunpack.c.l.s4 1934713408
      %v400 = vunpack.c.0.s8 %v399
      %v401 = vlaneseq
      %v402 = vshrl.u32 %v401, 7
      %v403 = vsub.s32 %v400, %v402
      %v404 = vrot.slane %v390, %v403
      %v405 = vcombine.high %v381, 0.0
      %v406 = vcombine.high %v388, 0.0
      %v407 = vcombine.high %v397, 0.0
      %v408 = vcombine.high %v404, 0.0
      %410 = vrot.lane.b32.xlu0 %v337, 16
      %v411 = vpop.permute.xlu0 %410
      %414 = vrot.lane.b32.xlu0 %v320, 32
      %v415 = vpop.permute.xlu0 %414
      %418 = vrot.lane.b32.xlu0 %v338, 48
      %v419 = vpop.permute.xlu0 %418
      %422 = vrot.lane.b32.xlu0 %v329, 64
      %v423 = vpop.permute.xlu0 %422
      %426 = vrot.lane.b32.xlu0 %v339, 80
      %v427 = vpop.permute.xlu0 %426
      %430 = vrot.lane.b32.xlu0 %v336, 96
      %v431 = vpop.permute.xlu0 %430
      %434 = vrot.lane.b32.xlu0 %v340, 112
      %v435 = vpop.permute.xlu0 %434
      %438 = vrot.lane.b32.xlu0 %v405, 16
      %v439 = vpop.permute.xlu0 %438
      %442 = vrot.lane.b32.xlu0 %v388, 32
      %v443 = vpop.permute.xlu0 %442
      %446 = vrot.lane.b32.xlu0 %v406, 48
      %v447 = vpop.permute.xlu0 %446
      %450 = vrot.lane.b32.xlu0 %v397, 64
      %v451 = vpop.permute.xlu0 %450
      %454 = vrot.lane.b32.xlu0 %v407, 80
      %v455 = vpop.permute.xlu0 %454
      %458 = vrot.lane.b32.xlu0 %v404, 96
      %v459 = vpop.permute.xlu0 %458
      %462 = vrot.lane.b32.xlu0 %v408, 112
      %v463 = vpop.permute.xlu0 %462
      %vm465 = vcmask 130048
      %v466 = vsel %vm465, %v313, %v411
      %vm467 = vcmask 261120
      %v468 = vsel %vm467, %v466, %v415
      %vm469 = vcmask 392192
      %v470 = vsel %vm469, %v468, %v419
      %vm471 = vcmask 523264
      %v472 = vsel %vm471, %v470, %v423
      %vm473 = vcmask 654336
      %v474 = vsel %vm473, %v472, %v427
      %vm475 = vcmask 785408
      %v476 = vsel %vm475, %v474, %v431
      %vm477 = vcmask 916480
      %v478 = vsel %vm477, %v476, %v435
      %v479 = vsel %vm465, %v381, %v439
      %v480 = vsel %vm467, %v479, %v443
      %v481 = vsel %vm469, %v480, %v447
      %v482 = vsel %vm471, %v481, %v451
      %v483 = vsel %vm473, %v482, %v455
      %v484 = vsel %vm475, %v483, %v459
      %v485 = vsel %vm477, %v484, %v463
      %494 = vrot.lane.b32.xlu0 %v265, 127
      %v495 = vpop.permute.xlu0 %494
      %496 = vrot.lane.b32.xlu0 %v266, 127
      %v497 = vpop.permute.xlu0 %496
      %498 = vrot.lane.b32.xlu0 %v267, 127
      %v499 = vpop.permute.xlu0 %498
      %500 = vrot.lane.b32.xlu0 %v268, 127
      %v501 = vpop.permute.xlu0 %500
      %502 = vrot.lane.b32.xlu0 %v269, 127
      %v503 = vpop.permute.xlu0 %502
      %504 = vrot.lane.b32.xlu0 %v270, 127
      %v505 = vpop.permute.xlu0 %504
      %506 = vrot.lane.b32.xlu0 %v271, 127
      %v507 = vpop.permute.xlu0 %506
      %508 = vrot.lane.b32.xlu0 %v272, 127
      %v509 = vpop.permute.xlu0 %508
      %v518 = vcombine.low %v495, %v503
      %v519 = vcombine.high %v495, %v503
      %v521 = vunpack.c.l.s4 1983009808
      %v522 = vunpack.c.0.s8 %v521
      %v523 = vlaneseq
      %v524 = vshrl.u32 %v523, 7
      %v525 = vsub.s32 %v522, %v524
      %v526 = vrot.slane %v518, %v525
      %v528 = vunpack.c.l.s4 1983009808
      %v529 = vunpack.c.0.s8 %v528
      %v530 = vlaneseq
      %v531 = vshrl.u32 %v530, 7
      %v532 = vsub.s32 %v529, %v531
      %v533 = vrot.slane %v519, %v532
      %v534 = vcombine.low %v499, %v507
      %v535 = vcombine.high %v499, %v507
      %v537 = vunpack.c.l.s4 1983009808
      %v538 = vunpack.c.0.s8 %v537
      %v539 = vlaneseq
      %v540 = vshrl.u32 %v539, 7
      %v541 = vsub.s32 %v538, %v540
      %v542 = vrot.slane %v534, %v541
      %v544 = vunpack.c.l.s4 1983009808
      %v545 = vunpack.c.0.s8 %v544
      %v546 = vlaneseq
      %v547 = vshrl.u32 %v546, 7
      %v548 = vsub.s32 %v545, %v547
      %v549 = vrot.slane %v535, %v548
      %v550 = vcombine.low %v526, %v542
      %v551 = vcombine.high %v526, %v542
      %v553 = vunpack.c.l.s4 1934713408
      %v554 = vunpack.c.0.s8 %v553
      %v555 = vlaneseq
      %v556 = vshrl.u32 %v555, 7
      %v557 = vsub.s32 %v554, %v556
      %v558 = vrot.slane %v550, %v557
      %v560 = vunpack.c.l.s4 1934713408
      %v561 = vunpack.c.0.s8 %v560
      %v562 = vlaneseq
      %v563 = vshrl.u32 %v562, 7
      %v564 = vsub.s32 %v561, %v563
      %v565 = vrot.slane %v551, %v564
      %v566 = vcombine.low %v533, %v549
      %v567 = vcombine.high %v533, %v549
      %v569 = vunpack.c.l.s4 1934713408
      %v570 = vunpack.c.0.s8 %v569
      %v571 = vlaneseq
      %v572 = vshrl.u32 %v571, 7
      %v573 = vsub.s32 %v570, %v572
      %v574 = vrot.slane %v566, %v573
      %v576 = vunpack.c.l.s4 1934713408
      %v577 = vunpack.c.0.s8 %v576
      %v578 = vlaneseq
      %v579 = vshrl.u32 %v578, 7
      %v580 = vsub.s32 %v577, %v579
      %v581 = vrot.slane %v567, %v580
      %v582 = vcombine.high %v558, 0.0
      %v583 = vcombine.high %v565, 0.0
      %v584 = vcombine.high %v574, 0.0
      %v585 = vcombine.high %v581, 0.0
      %v586 = vcombine.low %v497, %v505
      %v587 = vcombine.high %v497, %v505
      %v589 = vunpack.c.l.s4 1983009808
      %v590 = vunpack.c.0.s8 %v589
      %v591 = vlaneseq
      %v592 = vshrl.u32 %v591, 7
      %v593 = vsub.s32 %v590, %v592
      %v594 = vrot.slane %v586, %v593
      %v596 = vunpack.c.l.s4 1983009808
      %v597 = vunpack.c.0.s8 %v596
      %v598 = vlaneseq
      %v599 = vshrl.u32 %v598, 7
      %v600 = vsub.s32 %v597, %v599
      %v601 = vrot.slane %v587, %v600
      %v602 = vcombine.low %v501, %v509
      %v603 = vcombine.high %v501, %v509
      %v605 = vunpack.c.l.s4 1983009808
      %v606 = vunpack.c.0.s8 %v605
      %v607 = vlaneseq
      %v608 = vshrl.u32 %v607, 7
      %v609 = vsub.s32 %v606, %v608
      %v610 = vrot.slane %v602, %v609
      %v612 = vunpack.c.l.s4 1983009808
      %v613 = vunpack.c.0.s8 %v612
      %v614 = vlaneseq
      %v615 = vshrl.u32 %v614, 7
      %v616 = vsub.s32 %v613, %v615
      %v617 = vrot.slane %v603, %v616
      %v618 = vcombine.low %v594, %v610
      %v619 = vcombine.high %v594, %v610
      %v621 = vunpack.c.l.s4 1934713408
      %v622 = vunpack.c.0.s8 %v621
      %v623 = vlaneseq
      %v624 = vshrl.u32 %v623, 7
      %v625 = vsub.s32 %v622, %v624
      %v626 = vrot.slane %v618, %v625
      %v628 = vunpack.c.l.s4 1934713408
      %v629 = vunpack.c.0.s8 %v628
      %v630 = vlaneseq
      %v631 = vshrl.u32 %v630, 7
      %v632 = vsub.s32 %v629, %v631
      %v633 = vrot.slane %v619, %v632
      %v634 = vcombine.low %v601, %v617
      %v635 = vcombine.high %v601, %v617
      %v637 = vunpack.c.l.s4 1934713408
      %v638 = vunpack.c.0.s8 %v637
      %v639 = vlaneseq
      %v640 = vshrl.u32 %v639, 7
      %v641 = vsub.s32 %v638, %v640
      %v642 = vrot.slane %v634, %v641
      %v644 = vunpack.c.l.s4 1934713408
      %v645 = vunpack.c.0.s8 %v644
      %v646 = vlaneseq
      %v647 = vshrl.u32 %v646, 7
      %v648 = vsub.s32 %v645, %v647
      %v649 = vrot.slane %v635, %v648
      %v650 = vcombine.high %v626, 0.0
      %v651 = vcombine.high %v633, 0.0
      %v652 = vcombine.high %v642, 0.0
      %v653 = vcombine.high %v649, 0.0
      %655 = vrot.lane.b32.xlu0 %v582, 16
      %v656 = vpop.permute.xlu0 %655
      %659 = vrot.lane.b32.xlu0 %v565, 32
      %v660 = vpop.permute.xlu0 %659
      %663 = vrot.lane.b32.xlu0 %v583, 48
      %v664 = vpop.permute.xlu0 %663
      %667 = vrot.lane.b32.xlu0 %v574, 64
      %v668 = vpop.permute.xlu0 %667
      %671 = vrot.lane.b32.xlu0 %v584, 80
      %v672 = vpop.permute.xlu0 %671
      %675 = vrot.lane.b32.xlu0 %v581, 96
      %v676 = vpop.permute.xlu0 %675
      %679 = vrot.lane.b32.xlu0 %v585, 112
      %v680 = vpop.permute.xlu0 %679
      %683 = vrot.lane.b32.xlu0 %v650, 16
      %v684 = vpop.permute.xlu0 %683
      %687 = vrot.lane.b32.xlu0 %v633, 32
      %v688 = vpop.permute.xlu0 %687
      %691 = vrot.lane.b32.xlu0 %v651, 48
      %v692 = vpop.permute.xlu0 %691
      %695 = vrot.lane.b32.xlu0 %v642, 64
      %v696 = vpop.permute.xlu0 %695
      %699 = vrot.lane.b32.xlu0 %v652, 80
      %v700 = vpop.permute.xlu0 %699
      %703 = vrot.lane.b32.xlu0 %v649, 96
      %v704 = vpop.permute.xlu0 %703
      %707 = vrot.lane.b32.xlu0 %v653, 112
      %v708 = vpop.permute.xlu0 %707
      %v710 = vsel %vm465, %v558, %v656
      %v711 = vsel %vm467, %v710, %v660
      %v712 = vsel %vm469, %v711, %v664
      %v713 = vsel %vm471, %v712, %v668
      %v714 = vsel %vm473, %v713, %v672
      %v715 = vsel %vm475, %v714, %v676
      %v716 = vsel %vm477, %v715, %v680
      %v717 = vsel %vm465, %v626, %v684
      %v718 = vsel %vm467, %v717, %v688
      %v719 = vsel %vm469, %v718, %v692
      %v720 = vsel %vm471, %v719, %v696
      %v721 = vsel %vm473, %v720, %v700
      %v722 = vsel %vm475, %v721, %v704
      %v723 = vsel %vm477, %v722, %v708
      %724 = vrot.lane.b32.xlu0 %v265, 126
      %v725 = vpop.permute.xlu0 %724
      %726 = vrot.lane.b32.xlu0 %v266, 126
      %v727 = vpop.permute.xlu0 %726
      %728 = vrot.lane.b32.xlu0 %v267, 126
      %v729 = vpop.permute.xlu0 %728
      %730 = vrot.lane.b32.xlu0 %v268, 126
      %v731 = vpop.permute.xlu0 %730
      %732 = vrot.lane.b32.xlu0 %v269, 126
      %v733 = vpop.permute.xlu0 %732
      %734 = vrot.lane.b32.xlu0 %v270, 126
      %v735 = vpop.permute.xlu0 %734
      %736 = vrot.lane.b32.xlu0 %v271, 126
      %v737 = vpop.permute.xlu0 %736
      %738 = vrot.lane.b32.xlu0 %v272, 126
      %v739 = vpop.permute.xlu0 %738
      %v748 = vcombine.low %v725, %v733
      %v749 = vcombine.high %v725, %v733
      %v751 = vunpack.c.l.s4 1983009808
      %v752 = vunpack.c.0.s8 %v751
      %v753 = vlaneseq
      %v754 = vshrl.u32 %v753, 7
      %v755 = vsub.s32 %v752, %v754
      %v756 = vrot.slane %v748, %v755
      %v758 = vunpack.c.l.s4 1983009808
      %v759 = vunpack.c.0.s8 %v758
      %v760 = vlaneseq
      %v761 = vshrl.u32 %v760, 7
      %v762 = vsub.s32 %v759, %v761
      %v763 = vrot.slane %v749, %v762
      %v764 = vcombine.low %v729, %v737
      %v765 = vcombine.high %v729, %v737
      %v767 = vunpack.c.l.s4 1983009808
      %v768 = vunpack.c.0.s8 %v767
      %v769 = vlaneseq
      %v770 = vshrl.u32 %v769, 7
      %v771 = vsub.s32 %v768, %v770
      %v772 = vrot.slane %v764, %v771
      %v774 = vunpack.c.l.s4 1983009808
      %v775 = vunpack.c.0.s8 %v774
      %v776 = vlaneseq
      %v777 = vshrl.u32 %v776, 7
      %v778 = vsub.s32 %v775, %v777
      %v779 = vrot.slane %v765, %v778
      %v780 = vcombine.low %v756, %v772
      %v781 = vcombine.high %v756, %v772
      %v783 = vunpack.c.l.s4 1934713408
      %v784 = vunpack.c.0.s8 %v783
      %v785 = vlaneseq
      %v786 = vshrl.u32 %v785, 7
      %v787 = vsub.s32 %v784, %v786
      %v788 = vrot.slane %v780, %v787
      %v790 = vunpack.c.l.s4 1934713408
      %v791 = vunpack.c.0.s8 %v790
      %v792 = vlaneseq
      %v793 = vshrl.u32 %v792, 7
      %v794 = vsub.s32 %v791, %v793
      %v795 = vrot.slane %v781, %v794
      %v796 = vcombine.low %v763, %v779
      %v797 = vcombine.high %v763, %v779
      %v799 = vunpack.c.l.s4 1934713408
      %v800 = vunpack.c.0.s8 %v799
      %v801 = vlaneseq
      %v802 = vshrl.u32 %v801, 7
      %v803 = vsub.s32 %v800, %v802
      %v804 = vrot.slane %v796, %v803
      %v806 = vunpack.c.l.s4 1934713408
      %v807 = vunpack.c.0.s8 %v806
      %v808 = vlaneseq
      %v809 = vshrl.u32 %v808, 7
      %v810 = vsub.s32 %v807, %v809
      %v811 = vrot.slane %v797, %v810
      %v812 = vcombine.high %v788, 0.0
      %v813 = vcombine.high %v795, 0.0
      %v814 = vcombine.high %v804, 0.0
      %v815 = vcombine.high %v811, 0.0
      %v816 = vcombine.low %v727, %v735
      %v817 = vcombine.high %v727, %v735
      %v819 = vunpack.c.l.s4 1983009808
      %v820 = vunpack.c.0.s8 %v819
      %v821 = vlaneseq
      %v822 = vshrl.u32 %v821, 7
      %v823 = vsub.s32 %v820, %v822
      %v824 = vrot.slane %v816, %v823
      %v826 = vunpack.c.l.s4 1983009808
      %v827 = vunpack.c.0.s8 %v826
      %v828 = vlaneseq
      %v829 = vshrl.u32 %v828, 7
      %v830 = vsub.s32 %v827, %v829
      %v831 = vrot.slane %v817, %v830
      %v832 = vcombine.low %v731, %v739
      %v833 = vcombine.high %v731, %v739
      %v835 = vunpack.c.l.s4 1983009808
      %v836 = vunpack.c.0.s8 %v835
      %v837 = vlaneseq
      %v838 = vshrl.u32 %v837, 7
      %v839 = vsub.s32 %v836, %v838
      %v840 = vrot.slane %v832, %v839
      %v842 = vunpack.c.l.s4 1983009808
      %v843 = vunpack.c.0.s8 %v842
      %v844 = vlaneseq
      %v845 = vshrl.u32 %v844, 7
      %v846 = vsub.s32 %v843, %v845
      %v847 = vrot.slane %v833, %v846
      %v848 = vcombine.low %v824, %v840
      %v849 = vcombine.high %v824, %v840
      %v851 = vunpack.c.l.s4 1934713408
      %v852 = vunpack.c.0.s8 %v851
      %v853 = vlaneseq
      %v854 = vshrl.u32 %v853, 7
      %v855 = vsub.s32 %v852, %v854
      %v856 = vrot.slane %v848, %v855
      %v858 = vunpack.c.l.s4 1934713408
      %v859 = vunpack.c.0.s8 %v858
      %v860 = vlaneseq
      %v861 = vshrl.u32 %v860, 7
      %v862 = vsub.s32 %v859, %v861
      %v863 = vrot.slane %v849, %v862
      %v864 = vcombine.low %v831, %v847
      %v865 = vcombine.high %v831, %v847
      %v867 = vunpack.c.l.s4 1934713408
      %v868 = vunpack.c.0.s8 %v867
      %v869 = vlaneseq
      %v870 = vshrl.u32 %v869, 7
      %v871 = vsub.s32 %v868, %v870
      %v872 = vrot.slane %v864, %v871
      %v874 = vunpack.c.l.s4 1934713408
      %v875 = vunpack.c.0.s8 %v874
      %v876 = vlaneseq
      %v877 = vshrl.u32 %v876, 7
      %v878 = vsub.s32 %v875, %v877
      %v879 = vrot.slane %v865, %v878
      %v880 = vcombine.high %v856, 0.0
      %v881 = vcombine.high %v863, 0.0
      %v882 = vcombine.high %v872, 0.0
      %v883 = vcombine.high %v879, 0.0
      %885 = vrot.lane.b32.xlu0 %v812, 16
      %v886 = vpop.permute.xlu0 %885
      %889 = vrot.lane.b32.xlu0 %v795, 32
      %v890 = vpop.permute.xlu0 %889
      %893 = vrot.lane.b32.xlu0 %v813, 48
      %v894 = vpop.permute.xlu0 %893
      %897 = vrot.lane.b32.xlu0 %v804, 64
      %v898 = vpop.permute.xlu0 %897
      %901 = vrot.lane.b32.xlu0 %v814, 80
      %v902 = vpop.permute.xlu0 %901
      %905 = vrot.lane.b32.xlu0 %v811, 96
      %v906 = vpop.permute.xlu0 %905
      %909 = vrot.lane.b32.xlu0 %v815, 112
      %v910 = vpop.permute.xlu0 %909
      %913 = vrot.lane.b32.xlu0 %v880, 16
      %v914 = vpop.permute.xlu0 %913
      %917 = vrot.lane.b32.xlu0 %v863, 32
      %v918 = vpop.permute.xlu0 %917
      %921 = vrot.lane.b32.xlu0 %v881, 48
      %v922 = vpop.permute.xlu0 %921
      %925 = vrot.lane.b32.xlu0 %v872, 64
      %v926 = vpop.permute.xlu0 %925
      %929 = vrot.lane.b32.xlu0 %v882, 80
      %v930 = vpop.permute.xlu0 %929
      %933 = vrot.lane.b32.xlu0 %v879, 96
      %v934 = vpop.permute.xlu0 %933
      %937 = vrot.lane.b32.xlu0 %v883, 112
      %v938 = vpop.permute.xlu0 %937
      %v940 = vsel %vm465, %v788, %v886
      %v941 = vsel %vm467, %v940, %v890
      %v942 = vsel %vm469, %v941, %v894
      %v943 = vsel %vm471, %v942, %v898
      %v944 = vsel %vm473, %v943, %v902
      %v945 = vsel %vm475, %v944, %v906
      %v946 = vsel %vm477, %v945, %v910
      %v947 = vsel %vm465, %v856, %v914
      %v948 = vsel %vm467, %v947, %v918
      %v949 = vsel %vm469, %v948, %v922
      %v950 = vsel %vm471, %v949, %v926
      %v951 = vsel %vm473, %v950, %v930
      %v952 = vsel %vm475, %v951, %v934
      %v953 = vsel %vm477, %v952, %v938
      %v954 = vld [vmem:[#allocation2 + $0x1] sm:$0xff]
      %v955 = vld [vmem:[#allocation2 + $0x9] sm:$0xff]
      %v956 = vld [vmem:[#allocation2 + $0x19] sm:$0xff]
      %v957 = vld [vmem:[#allocation2 + $0x21] sm:$0xff]
      %v958 = vld [vmem:[#allocation2 + $0x31] sm:$0xff]
      %v959 = vld [vmem:[#allocation2 + $0x39] sm:$0xff]
      %v960 = vld [vmem:[#allocation2 + $0x49] sm:$0xff]
      %v961 = vld [vmem:[#allocation2 + $0x51] sm:$0xff]
      %v962 = vcombine.low %v954, %v958
      %v963 = vcombine.high %v954, %v958
      %v965 = vunpack.c.l.s4 1983009808
      %v966 = vunpack.c.0.s8 %v965
      %v967 = vlaneseq
      %v968 = vshrl.u32 %v967, 7
      %v969 = vsub.s32 %v966, %v968
      %v970 = vrot.slane %v962, %v969
      %v972 = vunpack.c.l.s4 1983009808
      %v973 = vunpack.c.0.s8 %v972
      %v974 = vlaneseq
      %v975 = vshrl.u32 %v974, 7
      %v976 = vsub.s32 %v973, %v975
      %v977 = vrot.slane %v963, %v976
      %v978 = vcombine.low %v956, %v960
      %v979 = vcombine.high %v956, %v960
      %v981 = vunpack.c.l.s4 1983009808
      %v982 = vunpack.c.0.s8 %v981
      %v983 = vlaneseq
      %v984 = vshrl.u32 %v983, 7
      %v985 = vsub.s32 %v982, %v984
      %v986 = vrot.slane %v978, %v985
      %v988 = vunpack.c.l.s4 1983009808
      %v989 = vunpack.c.0.s8 %v988
      %v990 = vlaneseq
      %v991 = vshrl.u32 %v990, 7
      %v992 = vsub.s32 %v989, %v991
      %v993 = vrot.slane %v979, %v992
      %v994 = vcombine.low %v970, %v986
      %v995 = vcombine.high %v970, %v986
      %v997 = vunpack.c.l.s4 1934713408
      %v998 = vunpack.c.0.s8 %v997
      %v999 = vlaneseq
      %v1000 = vshrl.u32 %v999, 7
      %v1001 = vsub.s32 %v998, %v1000
      %v1002 = vrot.slane %v994, %v1001
      %v1004 = vunpack.c.l.s4 1934713408
      %v1005 = vunpack.c.0.s8 %v1004
      %v1006 = vlaneseq
      %v1007 = vshrl.u32 %v1006, 7
      %v1008 = vsub.s32 %v1005, %v1007
      %v1009 = vrot.slane %v995, %v1008
      %v1010 = vcombine.low %v977, %v993
      %v1011 = vcombine.high %v977, %v993
      %v1013 = vunpack.c.l.s4 1934713408
      %v1014 = vunpack.c.0.s8 %v1013
      %v1015 = vlaneseq
      %v1016 = vshrl.u32 %v1015, 7
      %v1017 = vsub.s32 %v1014, %v1016
      %v1018 = vrot.slane %v1010, %v1017
      %v1020 = vunpack.c.l.s4 1934713408
      %v1021 = vunpack.c.0.s8 %v1020
      %v1022 = vlaneseq
      %v1023 = vshrl.u32 %v1022, 7
      %v1024 = vsub.s32 %v1021, %v1023
      %v1025 = vrot.slane %v1011, %v1024
      %v1026 = vcombine.high %v1002, 0.0
      %v1027 = vcombine.high %v1009, 0.0
      %v1028 = vcombine.high %v1018, 0.0
      %v1029 = vcombine.high %v1025, 0.0
      %v1030 = vcombine.low %v955, %v959
      %v1031 = vcombine.high %v955, %v959
      %v1033 = vunpack.c.l.s4 1983009808
      %v1034 = vunpack.c.0.s8 %v1033
      %v1035 = vlaneseq
      %v1036 = vshrl.u32 %v1035, 7
      %v1037 = vsub.s32 %v1034, %v1036
      %v1038 = vrot.slane %v1030, %v1037
      %v1040 = vunpack.c.l.s4 1983009808
      %v1041 = vunpack.c.0.s8 %v1040
      %v1042 = vlaneseq
      %v1043 = vshrl.u32 %v1042, 7
      %v1044 = vsub.s32 %v1041, %v1043
      %v1045 = vrot.slane %v1031, %v1044
      %v1046 = vcombine.low %v957, %v961
      %v1047 = vcombine.high %v957, %v961
      %v1049 = vunpack.c.l.s4 1983009808
      %v1050 = vunpack.c.0.s8 %v1049
      %v1051 = vlaneseq
      %v1052 = vshrl.u32 %v1051, 7
      %v1053 = vsub.s32 %v1050, %v1052
      %v1054 = vrot.slane %v1046, %v1053
      %v1056 = vunpack.c.l.s4 1983009808
      %v1057 = vunpack.c.0.s8 %v1056
      %v1058 = vlaneseq
      %v1059 = vshrl.u32 %v1058, 7
      %v1060 = vsub.s32 %v1057, %v1059
      %v1061 = vrot.slane %v1047, %v1060
      %v1062 = vcombine.low %v1038, %v1054
      %v1063 = vcombine.high %v1038, %v1054
      %v1065 = vunpack.c.l.s4 1934713408
      %v1066 = vunpack.c.0.s8 %v1065
      %v1067 = vlaneseq
      %v1068 = vshrl.u32 %v1067, 7
      %v1069 = vsub.s32 %v1066, %v1068
      %v1070 = vrot.slane %v1062, %v1069
      %v1072 = vunpack.c.l.s4 1934713408
      %v1073 = vunpack.c.0.s8 %v1072
      %v1074 = vlaneseq
      %v1075 = vshrl.u32 %v1074, 7
      %v1076 = vsub.s32 %v1073, %v1075
      %v1077 = vrot.slane %v1063, %v1076
      %v1078 = vcombine.low %v1045, %v1061
      %v1079 = vcombine.high %v1045, %v1061
      %v1081 = vunpack.c.l.s4 1934713408
      %v1082 = vunpack.c.0.s8 %v1081
      %v1083 = vlaneseq
      %v1084 = vshrl.u32 %v1083, 7
      %v1085 = vsub.s32 %v1082, %v1084
      %v1086 = vrot.slane %v1078, %v1085
      %v1088 = vunpack.c.l.s4 1934713408
      %v1089 = vunpack.c.0.s8 %v1088
      %v1090 = vlaneseq
      %v1091 = vshrl.u32 %v1090, 7
      %v1092 = vsub.s32 %v1089, %v1091
      %v1093 = vrot.slane %v1079, %v1092
      %v1094 = vcombine.high %v1070, 0.0
      %v1095 = vcombine.high %v1077, 0.0
      %v1096 = vcombine.high %v1086, 0.0
      %v1097 = vcombine.high %v1093, 0.0
      %1099 = vrot.lane.b32.xlu0 %v1026, 16
      %v1100 = vpop.permute.xlu0 %1099
      %1103 = vrot.lane.b32.xlu0 %v1009, 32
      %v1104 = vpop.permute.xlu0 %1103
      %1107 = vrot.lane.b32.xlu0 %v1027, 48
      %v1108 = vpop.permute.xlu0 %1107
      %1111 = vrot.lane.b32.xlu0 %v1018, 64
      %v1112 = vpop.permute.xlu0 %1111
      %1115 = vrot.lane.b32.xlu0 %v1028, 80
      %v1116 = vpop.permute.xlu0 %1115
      %1119 = vrot.lane.b32.xlu0 %v1025, 96
      %v1120 = vpop.permute.xlu0 %1119
      %1123 = vrot.lane.b32.xlu0 %v1029, 112
      %v1124 = vpop.permute.xlu0 %1123
      %1127 = vrot.lane.b32.xlu0 %v1094, 16
      %v1128 = vpop.permute.xlu0 %1127
      %1131 = vrot.lane.b32.xlu0 %v1077, 32
      %v1132 = vpop.permute.xlu0 %1131
      %1135 = vrot.lane.b32.xlu0 %v1095, 48
      %v1136 = vpop.permute.xlu0 %1135
      %1139 = vrot.lane.b32.xlu0 %v1086, 64
      %v1140 = vpop.permute.xlu0 %1139
      %1143 = vrot.lane.b32.xlu0 %v1096, 80
      %v1144 = vpop.permute.xlu0 %1143
      %1147 = vrot.lane.b32.xlu0 %v1093, 96
      %v1148 = vpop.permute.xlu0 %1147
      %1151 = vrot.lane.b32.xlu0 %v1097, 112
      %v1152 = vpop.permute.xlu0 %1151
      %v1154 = vsel %vm465, %v1002, %v1100
      %v1155 = vsel %vm467, %v1154, %v1104
      %v1156 = vsel %vm469, %v1155, %v1108
      %v1157 = vsel %vm471, %v1156, %v1112
      %v1158 = vsel %vm473, %v1157, %v1116
      %v1159 = vsel %vm475, %v1158, %v1120
      %v1160 = vsel %vm477, %v1159, %v1124
      %v1161 = vsel %vm465, %v1070, %v1128
      %v1162 = vsel %vm467, %v1161, %v1132
      %v1163 = vsel %vm469, %v1162, %v1136
      %v1164 = vsel %vm471, %v1163, %v1140
      %v1165 = vsel %vm473, %v1164, %v1144
      %v1166 = vsel %vm475, %v1165, %v1148
      %v1167 = vsel %vm477, %v1166, %v1152
      %1176 = vrot.lane.b32.xlu0 %v954, 127
      %v1177 = vpop.permute.xlu0 %1176
      %1178 = vrot.lane.b32.xlu0 %v955, 127
      %v1179 = vpop.permute.xlu0 %1178
      %1180 = vrot.lane.b32.xlu0 %v956, 127
      %v1181 = vpop.permute.xlu0 %1180
      %1182 = vrot.lane.b32.xlu0 %v957, 127
      %v1183 = vpop.permute.xlu0 %1182
      %1184 = vrot.lane.b32.xlu0 %v958, 127
      %v1185 = vpop.permute.xlu0 %1184
      %1186 = vrot.lane.b32.xlu0 %v959, 127
      %v1187 = vpop.permute.xlu0 %1186
      %1188 = vrot.lane.b32.xlu0 %v960, 127
      %v1189 = vpop.permute.xlu0 %1188
      %1190 = vrot.lane.b32.xlu0 %v961, 127
      %v1191 = vpop.permute.xlu0 %1190
      %v1200 = vcombine.low %v1177, %v1185
      %v1201 = vcombine.high %v1177, %v1185
      %v1203 = vunpack.c.l.s4 1983009808
      %v1204 = vunpack.c.0.s8 %v1203
      %v1205 = vlaneseq
      %v1206 = vshrl.u32 %v1205, 7
      %v1207 = vsub.s32 %v1204, %v1206
      %v1208 = vrot.slane %v1200, %v1207
      %v1210 = vunpack.c.l.s4 1983009808
      %v1211 = vunpack.c.0.s8 %v1210
      %v1212 = vlaneseq
      %v1213 = vshrl.u32 %v1212, 7
      %v1214 = vsub.s32 %v1211, %v1213
      %v1215 = vrot.slane %v1201, %v1214
      %v1216 = vcombine.low %v1181, %v1189
      %v1217 = vcombine.high %v1181, %v1189
      %v1219 = vunpack.c.l.s4 1983009808
      %v1220 = vunpack.c.0.s8 %v1219
      %v1221 = vlaneseq
      %v1222 = vshrl.u32 %v1221, 7
      %v1223 = vsub.s32 %v1220, %v1222
      %v1224 = vrot.slane %v1216, %v1223
      %v1226 = vunpack.c.l.s4 1983009808
      %v1227 = vunpack.c.0.s8 %v1226
      %v1228 = vlaneseq
      %v1229 = vshrl.u32 %v1228, 7
      %v1230 = vsub.s32 %v1227, %v1229
      %v1231 = vrot.slane %v1217, %v1230
      %v1232 = vcombine.low %v1208, %v1224
      %v1233 = vcombine.high %v1208, %v1224
      %v1235 = vunpack.c.l.s4 1934713408
      %v1236 = vunpack.c.0.s8 %v1235
      %v1237 = vlaneseq
      %v1238 = vshrl.u32 %v1237, 7
      %v1239 = vsub.s32 %v1236, %v1238
      %v1240 = vrot.slane %v1232, %v1239
      %v1242 = vunpack.c.l.s4 1934713408
      %v1243 = vunpack.c.0.s8 %v1242
      %v1244 = vlaneseq
      %v1245 = vshrl.u32 %v1244, 7
      %v1246 = vsub.s32 %v1243, %v1245
      %v1247 = vrot.slane %v1233, %v1246
      %v1248 = vcombine.low %v1215, %v1231
      %v1249 = vcombine.high %v1215, %v1231
      %v1251 = vunpack.c.l.s4 1934713408
      %v1252 = vunpack.c.0.s8 %v1251
      %v1253 = vlaneseq
      %v1254 = vshrl.u32 %v1253, 7
      %v1255 = vsub.s32 %v1252, %v1254
      %v1256 = vrot.slane %v1248, %v1255
      %v1258 = vunpack.c.l.s4 1934713408
      %v1259 = vunpack.c.0.s8 %v1258
      %v1260 = vlaneseq
      %v1261 = vshrl.u32 %v1260, 7
      %v1262 = vsub.s32 %v1259, %v1261
      %v1263 = vrot.slane %v1249, %v1262
      %v1264 = vcombine.high %v1240, 0.0
      %v1265 = vcombine.high %v1247, 0.0
      %v1266 = vcombine.high %v1256, 0.0
      %v1267 = vcombine.high %v1263, 0.0
      %v1268 = vcombine.low %v1179, %v1187
      %v1269 = vcombine.high %v1179, %v1187
      %v1271 = vunpack.c.l.s4 1983009808
      %v1272 = vunpack.c.0.s8 %v1271
      %v1273 = vlaneseq
      %v1274 = vshrl.u32 %v1273, 7
      %v1275 = vsub.s32 %v1272, %v1274
      %v1276 = vrot.slane %v1268, %v1275
      %v1278 = vunpack.c.l.s4 1983009808
      %v1279 = vunpack.c.0.s8 %v1278
      %v1280 = vlaneseq
      %v1281 = vshrl.u32 %v1280, 7
      %v1282 = vsub.s32 %v1279, %v1281
      %v1283 = vrot.slane %v1269, %v1282
      %v1284 = vcombine.low %v1183, %v1191
      %v1285 = vcombine.high %v1183, %v1191
      %v1287 = vunpack.c.l.s4 1983009808
      %v1288 = vunpack.c.0.s8 %v1287
      %v1289 = vlaneseq
      %v1290 = vshrl.u32 %v1289, 7
      %v1291 = vsub.s32 %v1288, %v1290
      %v1292 = vrot.slane %v1284, %v1291
      %v1294 = vunpack.c.l.s4 1983009808
      %v1295 = vunpack.c.0.s8 %v1294
      %v1296 = vlaneseq
      %v1297 = vshrl.u32 %v1296, 7
      %v1298 = vsub.s32 %v1295, %v1297
      %v1299 = vrot.slane %v1285, %v1298
      %v1300 = vcombine.low %v1276, %v1292
      %v1301 = vcombine.high %v1276, %v1292
      %v1303 = vunpack.c.l.s4 1934713408
      %v1304 = vunpack.c.0.s8 %v1303
      %v1305 = vlaneseq
      %v1306 = vshrl.u32 %v1305, 7
      %v1307 = vsub.s32 %v1304, %v1306
      %v1308 = vrot.slane %v1300, %v1307
      %v1310 = vunpack.c.l.s4 1934713408
      %v1311 = vunpack.c.0.s8 %v1310
      %v1312 = vlaneseq
      %v1313 = vshrl.u32 %v1312, 7
      %v1314 = vsub.s32 %v1311, %v1313
      %v1315 = vrot.slane %v1301, %v1314
      %v1316 = vcombine.low %v1283, %v1299
      %v1317 = vcombine.high %v1283, %v1299
      %v1319 = vunpack.c.l.s4 1934713408
      %v1320 = vunpack.c.0.s8 %v1319
      %v1321 = vlaneseq
      %v1322 = vshrl.u32 %v1321, 7
      %v1323 = vsub.s32 %v1320, %v1322
      %v1324 = vrot.slane %v1316, %v1323
      %v1326 = vunpack.c.l.s4 1934713408
      %v1327 = vunpack.c.0.s8 %v1326
      %v1328 = vlaneseq
      %v1329 = vshrl.u32 %v1328, 7
      %v1330 = vsub.s32 %v1327, %v1329
      %v1331 = vrot.slane %v1317, %v1330
      %v1332 = vcombine.high %v1308, 0.0
      %v1333 = vcombine.high %v1315, 0.0
      %v1334 = vcombine.high %v1324, 0.0
      %v1335 = vcombine.high %v1331, 0.0
      %1337 = vrot.lane.b32.xlu0 %v1264, 16
      %v1338 = vpop.permute.xlu0 %1337
      %1341 = vrot.lane.b32.xlu0 %v1247, 32
      %v1342 = vpop.permute.xlu0 %1341
      %1345 = vrot.lane.b32.xlu0 %v1265, 48
      %v1346 = vpop.permute.xlu0 %1345
      %1349 = vrot.lane.b32.xlu0 %v1256, 64
      %v1350 = vpop.permute.xlu0 %1349
      %1353 = vrot.lane.b32.xlu0 %v1266, 80
      %v1354 = vpop.permute.xlu0 %1353
      %1357 = vrot.lane.b32.xlu0 %v1263, 96
      %v1358 = vpop.permute.xlu0 %1357
      %1361 = vrot.lane.b32.xlu0 %v1267, 112
      %v1362 = vpop.permute.xlu0 %1361
      %1365 = vrot.lane.b32.xlu0 %v1332, 16
      %v1366 = vpop.permute.xlu0 %1365
      %1369 = vrot.lane.b32.xlu0 %v1315, 32
      %v1370 = vpop.permute.xlu0 %1369
      %1373 = vrot.lane.b32.xlu0 %v1333, 48
      %v1374 = vpop.permute.xlu0 %1373
      %1377 = vrot.lane.b32.xlu0 %v1324, 64
      %v1378 = vpop.permute.xlu0 %1377
      %1381 = vrot.lane.b32.xlu0 %v1334, 80
      %v1382 = vpop.permute.xlu0 %1381
      %1385 = vrot.lane.b32.xlu0 %v1331, 96
      %v1386 = vpop.permute.xlu0 %1385
      %1389 = vrot.lane.b32.xlu0 %v1335, 112
      %v1390 = vpop.permute.xlu0 %1389
      %v1392 = vsel %vm465, %v1240, %v1338
      %v1393 = vsel %vm467, %v1392, %v1342
      %v1394 = vsel %vm469, %v1393, %v1346
      %v1395 = vsel %vm471, %v1394, %v1350
      %v1396 = vsel %vm473, %v1395, %v1354
      %v1397 = vsel %vm475, %v1396, %v1358
      %v1398 = vsel %vm477, %v1397, %v1362
      %v1399 = vsel %vm465, %v1308, %v1366
      %v1400 = vsel %vm467, %v1399, %v1370
      %v1401 = vsel %vm469, %v1400, %v1374
      %v1402 = vsel %vm471, %v1401, %v1378
      %v1403 = vsel %vm473, %v1402, %v1382
      %v1404 = vsel %vm475, %v1403, %v1386
      %v1405 = vsel %vm477, %v1404, %v1390
      %1406 = vrot.lane.b32.xlu0 %v954, 126
      %v1407 = vpop.permute.xlu0 %1406
      %1408 = vrot.lane.b32.xlu0 %v955, 126
      %v1409 = vpop.permute.xlu0 %1408
      %1410 = vrot.lane.b32.xlu0 %v956, 126
      %v1411 = vpop.permute.xlu0 %1410
      %1412 = vrot.lane.b32.xlu0 %v957, 126
      %v1413 = vpop.permute.xlu0 %1412
      %1414 = vrot.lane.b32.xlu0 %v958, 126
      %v1415 = vpop.permute.xlu0 %1414
      %1416 = vrot.lane.b32.xlu0 %v959, 126
      %v1417 = vpop.permute.xlu0 %1416
      %1418 = vrot.lane.b32.xlu0 %v960, 126
      %v1419 = vpop.permute.xlu0 %1418
      %1420 = vrot.lane.b32.xlu0 %v961, 126
      %v1421 = vpop.permute.xlu0 %1420
      %v1430 = vcombine.low %v1407, %v1415
      %v1431 = vcombine.high %v1407, %v1415
      %v1433 = vunpack.c.l.s4 1983009808
      %v1434 = vunpack.c.0.s8 %v1433
      %v1435 = vlaneseq
      %v1436 = vshrl.u32 %v1435, 7
      %v1437 = vsub.s32 %v1434, %v1436
      %v1438 = vrot.slane %v1430, %v1437
      %v1440 = vunpack.c.l.s4 1983009808
      %v1441 = vunpack.c.0.s8 %v1440
      %v1442 = vlaneseq
      %v1443 = vshrl.u32 %v1442, 7
      %v1444 = vsub.s32 %v1441, %v1443
      %v1445 = vrot.slane %v1431, %v1444
      %v1446 = vcombine.low %v1411, %v1419
      %v1447 = vcombine.high %v1411, %v1419
      %v1449 = vunpack.c.l.s4 1983009808
      %v1450 = vunpack.c.0.s8 %v1449
      %v1451 = vlaneseq
      %v1452 = vshrl.u32 %v1451, 7
      %v1453 = vsub.s32 %v1450, %v1452
      %v1454 = vrot.slane %v1446, %v1453
      %v1456 = vunpack.c.l.s4 1983009808
      %v1457 = vunpack.c.0.s8 %v1456
      %v1458 = vlaneseq
      %v1459 = vshrl.u32 %v1458, 7
      %v1460 = vsub.s32 %v1457, %v1459
      %v1461 = vrot.slane %v1447, %v1460
      %v1462 = vcombine.low %v1438, %v1454
      %v1463 = vcombine.high %v1438, %v1454
      %v1465 = vunpack.c.l.s4 1934713408
      %v1466 = vunpack.c.0.s8 %v1465
      %v1467 = vlaneseq
      %v1468 = vshrl.u32 %v1467, 7
      %v1469 = vsub.s32 %v1466, %v1468
      %v1470 = vrot.slane %v1462, %v1469
      %v1472 = vunpack.c.l.s4 1934713408
      %v1473 = vunpack.c.0.s8 %v1472
      %v1474 = vlaneseq
      %v1475 = vshrl.u32 %v1474, 7
      %v1476 = vsub.s32 %v1473, %v1475
      %v1477 = vrot.slane %v1463, %v1476
      %v1478 = vcombine.low %v1445, %v1461
      %v1479 = vcombine.high %v1445, %v1461
      %v1481 = vunpack.c.l.s4 1934713408
      %v1482 = vunpack.c.0.s8 %v1481
      %v1483 = vlaneseq
      %v1484 = vshrl.u32 %v1483, 7
      %v1485 = vsub.s32 %v1482, %v1484
      %v1486 = vrot.slane %v1478, %v1485
      %v1488 = vunpack.c.l.s4 1934713408
      %v1489 = vunpack.c.0.s8 %v1488
      %v1490 = vlaneseq
      %v1491 = vshrl.u32 %v1490, 7
      %v1492 = vsub.s32 %v1489, %v1491
      %v1493 = vrot.slane %v1479, %v1492
      %v1494 = vcombine.high %v1470, 0.0
      %v1495 = vcombine.high %v1477, 0.0
      %v1496 = vcombine.high %v1486, 0.0
      %v1497 = vcombine.high %v1493, 0.0
      %v1498 = vcombine.low %v1409, %v1417
      %v1499 = vcombine.high %v1409, %v1417
      %v1501 = vunpack.c.l.s4 1983009808
      %v1502 = vunpack.c.0.s8 %v1501
      %v1503 = vlaneseq
      %v1504 = vshrl.u32 %v1503, 7
      %v1505 = vsub.s32 %v1502, %v1504
      %v1506 = vrot.slane %v1498, %v1505
      %v1508 = vunpack.c.l.s4 1983009808
      %v1509 = vunpack.c.0.s8 %v1508
      %v1510 = vlaneseq
      %v1511 = vshrl.u32 %v1510, 7
      %v1512 = vsub.s32 %v1509, %v1511
      %v1513 = vrot.slane %v1499, %v1512
      %v1514 = vcombine.low %v1413, %v1421
      %v1515 = vcombine.high %v1413, %v1421
      %v1517 = vunpack.c.l.s4 1983009808
      %v1518 = vunpack.c.0.s8 %v1517
      %v1519 = vlaneseq
      %v1520 = vshrl.u32 %v1519, 7
      %v1521 = vsub.s32 %v1518, %v1520
      %v1522 = vrot.slane %v1514, %v1521
      %v1524 = vunpack.c.l.s4 1983009808
      %v1525 = vunpack.c.0.s8 %v1524
      %v1526 = vlaneseq
      %v1527 = vshrl.u32 %v1526, 7
      %v1528 = vsub.s32 %v1525, %v1527
      %v1529 = vrot.slane %v1515, %v1528
      %v1530 = vcombine.low %v1506, %v1522
      %v1531 = vcombine.high %v1506, %v1522
      %v1533 = vunpack.c.l.s4 1934713408
      %v1534 = vunpack.c.0.s8 %v1533
      %v1535 = vlaneseq
      %v1536 = vshrl.u32 %v1535, 7
      %v1537 = vsub.s32 %v1534, %v1536
      %v1538 = vrot.slane %v1530, %v1537
      %v1540 = vunpack.c.l.s4 1934713408
      %v1541 = vunpack.c.0.s8 %v1540
      %v1542 = vlaneseq
      %v1543 = vshrl.u32 %v1542, 7
      %v1544 = vsub.s32 %v1541, %v1543
      %v1545 = vrot.slane %v1531, %v1544
      %v1546 = vcombine.low %v1513, %v1529
      %v1547 = vcombine.high %v1513, %v1529
      %v1549 = vunpack.c.l.s4 1934713408
      %v1550 = vunpack.c.0.s8 %v1549
      %v1551 = vlaneseq
      %v1552 = vshrl.u32 %v1551, 7
      %v1553 = vsub.s32 %v1550, %v1552
      %v1554 = vrot.slane %v1546, %v1553
      %v1556 = vunpack.c.l.s4 1934713408
      %v1557 = vunpack.c.0.s8 %v1556
      %v1558 = vlaneseq
      %v1559 = vshrl.u32 %v1558, 7
      %v1560 = vsub.s32 %v1557, %v1559
      %v1561 = vrot.slane %v1547, %v1560
      %v1562 = vcombine.high %v1538, 0.0
      %v1563 = vcombine.high %v1545, 0.0
      %v1564 = vcombine.high %v1554, 0.0
      %v1565 = vcombine.high %v1561, 0.0
      %1567 = vrot.lane.b32.xlu0 %v1494, 16
      %v1568 = vpop.permute.xlu0 %1567
      %1571 = vrot.lane.b32.xlu0 %v1477, 32
      %v1572 = vpop.permute.xlu0 %1571
      %1575 = vrot.lane.b32.xlu0 %v1495, 48
      %v1576 = vpop.permute.xlu0 %1575
      %1579 = vrot.lane.b32.xlu0 %v1486, 64
      %v1580 = vpop.permute.xlu0 %1579
      %1583 = vrot.lane.b32.xlu0 %v1496, 80
      %v1584 = vpop.permute.xlu0 %1583
      %1587 = vrot.lane.b32.xlu0 %v1493, 96
      %v1588 = vpop.permute.xlu0 %1587
      %1591 = vrot.lane.b32.xlu0 %v1497, 112
      %v1592 = vpop.permute.xlu0 %1591
      %1595 = vrot.lane.b32.xlu0 %v1562, 16
      %v1596 = vpop.permute.xlu0 %1595
      %1599 = vrot.lane.b32.xlu0 %v1545, 32
      %v1600 = vpop.permute.xlu0 %1599
      %1603 = vrot.lane.b32.xlu0 %v1563, 48
      %v1604 = vpop.permute.xlu0 %1603
      %1607 = vrot.lane.b32.xlu0 %v1554, 64
      %v1608 = vpop.permute.xlu0 %1607
      %1611 = vrot.lane.b32.xlu0 %v1564, 80
      %v1612 = vpop.permute.xlu0 %1611
      %1615 = vrot.lane.b32.xlu0 %v1561, 96
      %v1616 = vpop.permute.xlu0 %1615
      %1619 = vrot.lane.b32.xlu0 %v1565, 112
      %v1620 = vpop.permute.xlu0 %1619
      %v1622 = vsel %vm465, %v1470, %v1568
      %v1623 = vsel %vm467, %v1622, %v1572
      %v1624 = vsel %vm469, %v1623, %v1576
      %v1625 = vsel %vm471, %v1624, %v1580
      %v1626 = vsel %vm473, %v1625, %v1584
      %v1627 = vsel %vm475, %v1626, %v1588
      %v1628 = vsel %vm477, %v1627, %v1592
      %v1629 = vsel %vm465, %v1538, %v1596
      %v1630 = vsel %vm467, %v1629, %v1600
      %v1631 = vsel %vm469, %v1630, %v1604
      %v1632 = vsel %vm471, %v1631, %v1608
      %v1633 = vsel %vm473, %v1632, %v1612
      %v1634 = vsel %vm475, %v1633, %v1616
      %v1635 = vsel %vm477, %v1634, %v1620
      %v1636 = vld [vmem:[#allocation2 + $0x2] sm:$0xff]
      %v1637 = vld [vmem:[#allocation2 + $0xa] sm:$0xff]
      %v1638 = vld [vmem:[#allocation2 + $0x1a] sm:$0xff]
      %v1639 = vld [vmem:[#allocation2 + $0x22] sm:$0xff]
      %v1640 = vld [vmem:[#allocation2 + $0x32] sm:$0xff]
      %v1641 = vld [vmem:[#allocation2 + $0x3a] sm:$0xff]
      %v1642 = vld [vmem:[#allocation2 + $0x4a] sm:$0xff]
      %v1643 = vld [vmem:[#allocation2 + $0x52] sm:$0xff]
      %v1644 = vcombine.low %v1636, %v1640
      %v1645 = vcombine.high %v1636, %v1640
      %v1647 = vunpack.c.l.s4 1983009808
      %v1648 = vunpack.c.0.s8 %v1647
      %v1649 = vlaneseq
      %v1650 = vshrl.u32 %v1649, 7
      %v1651 = vsub.s32 %v1648, %v1650
      %v1652 = vrot.slane %v1644, %v1651
      %v1654 = vunpack.c.l.s4 1983009808
      %v1655 = vunpack.c.0.s8 %v1654
      %v1656 = vlaneseq
      %v1657 = vshrl.u32 %v1656, 7
      %v1658 = vsub.s32 %v1655, %v1657
      %v1659 = vrot.slane %v1645, %v1658
      %v1660 = vcombine.low %v1638, %v1642
      %v1661 = vcombine.high %v1638, %v1642
      %v1663 = vunpack.c.l.s4 1983009808
      %v1664 = vunpack.c.0.s8 %v1663
      %v1665 = vlaneseq
      %v1666 = vshrl.u32 %v1665, 7
      %v1667 = vsub.s32 %v1664, %v1666
      %v1668 = vrot.slane %v1660, %v1667
      %v1670 = vunpack.c.l.s4 1983009808
      %v1671 = vunpack.c.0.s8 %v1670
      %v1672 = vlaneseq
      %v1673 = vshrl.u32 %v1672, 7
      %v1674 = vsub.s32 %v1671, %v1673
      %v1675 = vrot.slane %v1661, %v1674
      %v1676 = vcombine.low %v1652, %v1668
      %v1677 = vcombine.high %v1652, %v1668
      %v1679 = vunpack.c.l.s4 1934713408
      %v1680 = vunpack.c.0.s8 %v1679
      %v1681 = vlaneseq
      %v1682 = vshrl.u32 %v1681, 7
      %v1683 = vsub.s32 %v1680, %v1682
      %v1684 = vrot.slane %v1676, %v1683
      %v1686 = vunpack.c.l.s4 1934713408
      %v1687 = vunpack.c.0.s8 %v1686
      %v1688 = vlaneseq
      %v1689 = vshrl.u32 %v1688, 7
      %v1690 = vsub.s32 %v1687, %v1689
      %v1691 = vrot.slane %v1677, %v1690
      %v1692 = vcombine.low %v1659, %v1675
      %v1693 = vcombine.high %v1659, %v1675
      %v1695 = vunpack.c.l.s4 1934713408
      %v1696 = vunpack.c.0.s8 %v1695
      %v1697 = vlaneseq
      %v1698 = vshrl.u32 %v1697, 7
      %v1699 = vsub.s32 %v1696, %v1698
      %v1700 = vrot.slane %v1692, %v1699
      %v1702 = vunpack.c.l.s4 1934713408
      %v1703 = vunpack.c.0.s8 %v1702
      %v1704 = vlaneseq
      %v1705 = vshrl.u32 %v1704, 7
      %v1706 = vsub.s32 %v1703, %v1705
      %v1707 = vrot.slane %v1693, %v1706
      %v1708 = vcombine.high %v1684, 0.0
      %v1709 = vcombine.high %v1691, 0.0
      %v1710 = vcombine.high %v1700, 0.0
      %v1711 = vcombine.high %v1707, 0.0
      %v1712 = vcombine.low %v1637, %v1641
      %v1713 = vcombine.high %v1637, %v1641
      %v1715 = vunpack.c.l.s4 1983009808
      %v1716 = vunpack.c.0.s8 %v1715
      %v1717 = vlaneseq
      %v1718 = vshrl.u32 %v1717, 7
      %v1719 = vsub.s32 %v1716, %v1718
      %v1720 = vrot.slane %v1712, %v1719
      %v1722 = vunpack.c.l.s4 1983009808
      %v1723 = vunpack.c.0.s8 %v1722
      %v1724 = vlaneseq
      %v1725 = vshrl.u32 %v1724, 7
      %v1726 = vsub.s32 %v1723, %v1725
      %v1727 = vrot.slane %v1713, %v1726
      %v1728 = vcombine.low %v1639, %v1643
      %v1729 = vcombine.high %v1639, %v1643
      %v1731 = vunpack.c.l.s4 1983009808
      %v1732 = vunpack.c.0.s8 %v1731
      %v1733 = vlaneseq
      %v1734 = vshrl.u32 %v1733, 7
      %v1735 = vsub.s32 %v1732, %v1734
      %v1736 = vrot.slane %v1728, %v1735
      %v1738 = vunpack.c.l.s4 1983009808
      %v1739 = vunpack.c.0.s8 %v1738
      %v1740 = vlaneseq
      %v1741 = vshrl.u32 %v1740, 7
      %v1742 = vsub.s32 %v1739, %v1741
      %v1743 = vrot.slane %v1729, %v1742
      %v1744 = vcombine.low %v1720, %v1736
      %v1745 = vcombine.high %v1720, %v1736
      %v1747 = vunpack.c.l.s4 1934713408
      %v1748 = vunpack.c.0.s8 %v1747
      %v1749 = vlaneseq
      %v1750 = vshrl.u32 %v1749, 7
      %v1751 = vsub.s32 %v1748, %v1750
      %v1752 = vrot.slane %v1744, %v1751
      %v1754 = vunpack.c.l.s4 1934713408
      %v1755 = vunpack.c.0.s8 %v1754
      %v1756 = vlaneseq
      %v1757 = vshrl.u32 %v1756, 7
      %v1758 = vsub.s32 %v1755, %v1757
      %v1759 = vrot.slane %v1745, %v1758
      %v1760 = vcombine.low %v1727, %v1743
      %v1761 = vcombine.high %v1727, %v1743
      %v1763 = vunpack.c.l.s4 1934713408
      %v1764 = vunpack.c.0.s8 %v1763
      %v1765 = vlaneseq
      %v1766 = vshrl.u32 %v1765, 7
      %v1767 = vsub.s32 %v1764, %v1766
      %v1768 = vrot.slane %v1760, %v1767
      %v1770 = vunpack.c.l.s4 1934713408
      %v1771 = vunpack.c.0.s8 %v1770
      %v1772 = vlaneseq
      %v1773 = vshrl.u32 %v1772, 7
      %v1774 = vsub.s32 %v1771, %v1773
      %v1775 = vrot.slane %v1761, %v1774
      %v1776 = vcombine.high %v1752, 0.0
      %v1777 = vcombine.high %v1759, 0.0
      %v1778 = vcombine.high %v1768, 0.0
      %v1779 = vcombine.high %v1775, 0.0
      %1781 = vrot.lane.b32.xlu0 %v1708, 16
      %v1782 = vpop.permute.xlu0 %1781
      %1785 = vrot.lane.b32.xlu0 %v1691, 32
      %v1786 = vpop.permute.xlu0 %1785
      %1789 = vrot.lane.b32.xlu0 %v1709, 48
      %v1790 = vpop.permute.xlu0 %1789
      %1793 = vrot.lane.b32.xlu0 %v1700, 64
      %v1794 = vpop.permute.xlu0 %1793
      %1797 = vrot.lane.b32.xlu0 %v1710, 80
      %v1798 = vpop.permute.xlu0 %1797
      %1801 = vrot.lane.b32.xlu0 %v1707, 96
      %v1802 = vpop.permute.xlu0 %1801
      %1805 = vrot.lane.b32.xlu0 %v1711, 112
      %v1806 = vpop.permute.xlu0 %1805
      %1809 = vrot.lane.b32.xlu0 %v1776, 16
      %v1810 = vpop.permute.xlu0 %1809
      %1813 = vrot.lane.b32.xlu0 %v1759, 32
      %v1814 = vpop.permute.xlu0 %1813
      %1817 = vrot.lane.b32.xlu0 %v1777, 48
      %v1818 = vpop.permute.xlu0 %1817
      %1821 = vrot.lane.b32.xlu0 %v1768, 64
      %v1822 = vpop.permute.xlu0 %1821
      %1825 = vrot.lane.b32.xlu0 %v1778, 80
      %v1826 = vpop.permute.xlu0 %1825
      %1829 = vrot.lane.b32.xlu0 %v1775, 96
      %v1830 = vpop.permute.xlu0 %1829
      %1833 = vrot.lane.b32.xlu0 %v1779, 112
      %v1834 = vpop.permute.xlu0 %1833
      %v1836 = vsel %vm465, %v1684, %v1782
      %v1837 = vsel %vm467, %v1836, %v1786
      %v1838 = vsel %vm469, %v1837, %v1790
      %v1839 = vsel %vm471, %v1838, %v1794
      %v1840 = vsel %vm473, %v1839, %v1798
      %v1841 = vsel %vm475, %v1840, %v1802
      %v1842 = vsel %vm477, %v1841, %v1806
      %v1843 = vsel %vm465, %v1752, %v1810
      %v1844 = vsel %vm467, %v1843, %v1814
      %v1845 = vsel %vm469, %v1844, %v1818
      %v1846 = vsel %vm471, %v1845, %v1822
      %v1847 = vsel %vm473, %v1846, %v1826
      %v1848 = vsel %vm475, %v1847, %v1830
      %v1849 = vsel %vm477, %v1848, %v1834
      %1858 = vrot.lane.b32.xlu0 %v1636, 127
      %v1859 = vpop.permute.xlu0 %1858
      %1860 = vrot.lane.b32.xlu0 %v1637, 127
      %v1861 = vpop.permute.xlu0 %1860
      %1862 = vrot.lane.b32.xlu0 %v1638, 127
      %v1863 = vpop.permute.xlu0 %1862
      %1864 = vrot.lane.b32.xlu0 %v1639, 127
      %v1865 = vpop.permute.xlu0 %1864
      %1866 = vrot.lane.b32.xlu0 %v1640, 127
      %v1867 = vpop.permute.xlu0 %1866
      %1868 = vrot.lane.b32.xlu0 %v1641, 127
      %v1869 = vpop.permute.xlu0 %1868
      %1870 = vrot.lane.b32.xlu0 %v1642, 127
      %v1871 = vpop.permute.xlu0 %1870
      %1872 = vrot.lane.b32.xlu0 %v1643, 127
      %v1873 = vpop.permute.xlu0 %1872
      %v1882 = vcombine.low %v1859, %v1867
      %v1883 = vcombine.high %v1859, %v1867
      %v1885 = vunpack.c.l.s4 1983009808
      %v1886 = vunpack.c.0.s8 %v1885
      %v1887 = vlaneseq
      %v1888 = vshrl.u32 %v1887, 7
      %v1889 = vsub.s32 %v1886, %v1888
      %v1890 = vrot.slane %v1882, %v1889
      %v1892 = vunpack.c.l.s4 1983009808
      %v1893 = vunpack.c.0.s8 %v1892
      %v1894 = vlaneseq
      %v1895 = vshrl.u32 %v1894, 7
      %v1896 = vsub.s32 %v1893, %v1895
      %v1897 = vrot.slane %v1883, %v1896
      %v1898 = vcombine.low %v1863, %v1871
      %v1899 = vcombine.high %v1863, %v1871
      %v1901 = vunpack.c.l.s4 1983009808
      %v1902 = vunpack.c.0.s8 %v1901
      %v1903 = vlaneseq
      %v1904 = vshrl.u32 %v1903, 7
      %v1905 = vsub.s32 %v1902, %v1904
      %v1906 = vrot.slane %v1898, %v1905
      %v1908 = vunpack.c.l.s4 1983009808
      %v1909 = vunpack.c.0.s8 %v1908
      %v1910 = vlaneseq
      %v1911 = vshrl.u32 %v1910, 7
      %v1912 = vsub.s32 %v1909, %v1911
      %v1913 = vrot.slane %v1899, %v1912
      %v1914 = vcombine.low %v1890, %v1906
      %v1915 = vcombine.high %v1890, %v1906
      %v1917 = vunpack.c.l.s4 1934713408
      %v1918 = vunpack.c.0.s8 %v1917
      %v1919 = vlaneseq
      %v1920 = vshrl.u32 %v1919, 7
      %v1921 = vsub.s32 %v1918, %v1920
      %v1922 = vrot.slane %v1914, %v1921
      %v1924 = vunpack.c.l.s4 1934713408
      %v1925 = vunpack.c.0.s8 %v1924
      %v1926 = vlaneseq
      %v1927 = vshrl.u32 %v1926, 7
      %v1928 = vsub.s32 %v1925, %v1927
      %v1929 = vrot.slane %v1915, %v1928
      %v1930 = vcombine.low %v1897, %v1913
      %v1931 = vcombine.high %v1897, %v1913
      %v1933 = vunpack.c.l.s4 1934713408
      %v1934 = vunpack.c.0.s8 %v1933
      %v1935 = vlaneseq
      %v1936 = vshrl.u32 %v1935, 7
      %v1937 = vsub.s32 %v1934, %v1936
      %v1938 = vrot.slane %v1930, %v1937
      %v1940 = vunpack.c.l.s4 1934713408
      %v1941 = vunpack.c.0.s8 %v1940
      %v1942 = vlaneseq
      %v1943 = vshrl.u32 %v1942, 7
      %v1944 = vsub.s32 %v1941, %v1943
      %v1945 = vrot.slane %v1931, %v1944
      %v1946 = vcombine.high %v1922, 0.0
      %v1947 = vcombine.high %v1929, 0.0
      %v1948 = vcombine.high %v1938, 0.0
      %v1949 = vcombine.high %v1945, 0.0
      %v1950 = vcombine.low %v1861, %v1869
      %v1951 = vcombine.high %v1861, %v1869
      %v1953 = vunpack.c.l.s4 1983009808
      %v1954 = vunpack.c.0.s8 %v1953
      %v1955 = vlaneseq
      %v1956 = vshrl.u32 %v1955, 7
      %v1957 = vsub.s32 %v1954, %v1956
      %v1958 = vrot.slane %v1950, %v1957
      %v1960 = vunpack.c.l.s4 1983009808
      %v1961 = vunpack.c.0.s8 %v1960
      %v1962 = vlaneseq
      %v1963 = vshrl.u32 %v1962, 7
      %v1964 = vsub.s32 %v1961, %v1963
      %v1965 = vrot.slane %v1951, %v1964
      %v1966 = vcombine.low %v1865, %v1873
      %v1967 = vcombine.high %v1865, %v1873
      %v1969 = vunpack.c.l.s4 1983009808
      %v1970 = vunpack.c.0.s8 %v1969
      %v1971 = vlaneseq
      %v1972 = vshrl.u32 %v1971, 7
      %v1973 = vsub.s32 %v1970, %v1972
      %v1974 = vrot.slane %v1966, %v1973
      %v1976 = vunpack.c.l.s4 1983009808
      %v1977 = vunpack.c.0.s8 %v1976
      %v1978 = vlaneseq
      %v1979 = vshrl.u32 %v1978, 7
      %v1980 = vsub.s32 %v1977, %v1979
      %v1981 = vrot.slane %v1967, %v1980
      %v1982 = vcombine.low %v1958, %v1974
      %v1983 = vcombine.high %v1958, %v1974
      %v1985 = vunpack.c.l.s4 1934713408
      %v1986 = vunpack.c.0.s8 %v1985
      %v1987 = vlaneseq
      %v1988 = vshrl.u32 %v1987, 7
      %v1989 = vsub.s32 %v1986, %v1988
      %v1990 = vrot.slane %v1982, %v1989
      %v1992 = vunpack.c.l.s4 1934713408
      %v1993 = vunpack.c.0.s8 %v1992
      %v1994 = vlaneseq
      %v1995 = vshrl.u32 %v1994, 7
      %v1996 = vsub.s32 %v1993, %v1995
      %v1997 = vrot.slane %v1983, %v1996
      %v1998 = vcombine.low %v1965, %v1981
      %v1999 = vcombine.high %v1965, %v1981
      %v2001 = vunpack.c.l.s4 1934713408
      %v2002 = vunpack.c.0.s8 %v2001
      %v2003 = vlaneseq
      %v2004 = vshrl.u32 %v2003, 7
      %v2005 = vsub.s32 %v2002, %v2004
      %v2006 = vrot.slane %v1998, %v2005
      %v2008 = vunpack.c.l.s4 1934713408
      %v2009 = vunpack.c.0.s8 %v2008
      %v2010 = vlaneseq
      %v2011 = vshrl.u32 %v2010, 7
      %v2012 = vsub.s32 %v2009, %v2011
      %v2013 = vrot.slane %v1999, %v2012
      %v2014 = vcombine.high %v1990, 0.0
      %v2015 = vcombine.high %v1997, 0.0
      %v2016 = vcombine.high %v2006, 0.0
      %v2017 = vcombine.high %v2013, 0.0
      %2019 = vrot.lane.b32.xlu0 %v1946, 16
      %v2020 = vpop.permute.xlu0 %2019
      %2023 = vrot.lane.b32.xlu0 %v1929, 32
      %v2024 = vpop.permute.xlu0 %2023
      %2027 = vrot.lane.b32.xlu0 %v1947, 48
      %v2028 = vpop.permute.xlu0 %2027
      %2031 = vrot.lane.b32.xlu0 %v1938, 64
      %v2032 = vpop.permute.xlu0 %2031
      %2035 = vrot.lane.b32.xlu0 %v1948, 80
      %v2036 = vpop.permute.xlu0 %2035
      %2039 = vrot.lane.b32.xlu0 %v1945, 96
      %v2040 = vpop.permute.xlu0 %2039
      %2043 = vrot.lane.b32.xlu0 %v1949, 112
      %v2044 = vpop.permute.xlu0 %2043
      %2047 = vrot.lane.b32.xlu0 %v2014, 16
      %v2048 = vpop.permute.xlu0 %2047
      %2051 = vrot.lane.b32.xlu0 %v1997, 32
      %v2052 = vpop.permute.xlu0 %2051
      %2055 = vrot.lane.b32.xlu0 %v2015, 48
      %v2056 = vpop.permute.xlu0 %2055
      %2059 = vrot.lane.b32.xlu0 %v2006, 64
      %v2060 = vpop.permute.xlu0 %2059
      %2063 = vrot.lane.b32.xlu0 %v2016, 80
      %v2064 = vpop.permute.xlu0 %2063
      %2067 = vrot.lane.b32.xlu0 %v2013, 96
      %v2068 = vpop.permute.xlu0 %2067
      %2071 = vrot.lane.b32.xlu0 %v2017, 112
      %v2072 = vpop.permute.xlu0 %2071
      %v2074 = vsel %vm465, %v1922, %v2020
      %v2075 = vsel %vm467, %v2074, %v2024
      %v2076 = vsel %vm469, %v2075, %v2028
      %v2077 = vsel %vm471, %v2076, %v2032
      %v2078 = vsel %vm473, %v2077, %v2036
      %v2079 = vsel %vm475, %v2078, %v2040
      %v2080 = vsel %vm477, %v2079, %v2044
      %v2081 = vsel %vm465, %v1990, %v2048
      %v2082 = vsel %vm467, %v2081, %v2052
      %v2083 = vsel %vm469, %v2082, %v2056
      %v2084 = vsel %vm471, %v2083, %v2060
      %v2085 = vsel %vm473, %v2084, %v2064
      %v2086 = vsel %vm475, %v2085, %v2068
      %v2087 = vsel %vm477, %v2086, %v2072
      %2088 = vrot.lane.b32.xlu0 %v1636, 126
      %v2089 = vpop.permute.xlu0 %2088
      %2090 = vrot.lane.b32.xlu0 %v1637, 126
      %v2091 = vpop.permute.xlu0 %2090
      %2092 = vrot.lane.b32.xlu0 %v1638, 126
      %v2093 = vpop.permute.xlu0 %2092
      %2094 = vrot.lane.b32.xlu0 %v1639, 126
      %v2095 = vpop.permute.xlu0 %2094
      %2096 = vrot.lane.b32.xlu0 %v1640, 126
      %v2097 = vpop.permute.xlu0 %2096
      %2098 = vrot.lane.b32.xlu0 %v1641, 126
      %v2099 = vpop.permute.xlu0 %2098
      %2100 = vrot.lane.b32.xlu0 %v1642, 126
      %v2101 = vpop.permute.xlu0 %2100
      %2102 = vrot.lane.b32.xlu0 %v1643, 126
      %v2103 = vpop.permute.xlu0 %2102
      %v2112 = vcombine.low %v2089, %v2097
      %v2113 = vcombine.high %v2089, %v2097
      %v2115 = vunpack.c.l.s4 1983009808
      %v2116 = vunpack.c.0.s8 %v2115
      %v2117 = vlaneseq
      %v2118 = vshrl.u32 %v2117, 7
      %v2119 = vsub.s32 %v2116, %v2118
      %v2120 = vrot.slane %v2112, %v2119
      %v2122 = vunpack.c.l.s4 1983009808
      %v2123 = vunpack.c.0.s8 %v2122
      %v2124 = vlaneseq
      %v2125 = vshrl.u32 %v2124, 7
      %v2126 = vsub.s32 %v2123, %v2125
      %v2127 = vrot.slane %v2113, %v2126
      %v2128 = vcombine.low %v2093, %v2101
      %v2129 = vcombine.high %v2093, %v2101
      %v2131 = vunpack.c.l.s4 1983009808
      %v2132 = vunpack.c.0.s8 %v2131
      %v2133 = vlaneseq
      %v2134 = vshrl.u32 %v2133, 7
      %v2135 = vsub.s32 %v2132, %v2134
      %v2136 = vrot.slane %v2128, %v2135
      %v2138 = vunpack.c.l.s4 1983009808
      %v2139 = vunpack.c.0.s8 %v2138
      %v2140 = vlaneseq
      %v2141 = vshrl.u32 %v2140, 7
      %v2142 = vsub.s32 %v2139, %v2141
      %v2143 = vrot.slane %v2129, %v2142
      %v2144 = vcombine.low %v2120, %v2136
      %v2145 = vcombine.high %v2120, %v2136
      %v2147 = vunpack.c.l.s4 1934713408
      %v2148 = vunpack.c.0.s8 %v2147
      %v2149 = vlaneseq
      %v2150 = vshrl.u32 %v2149, 7
      %v2151 = vsub.s32 %v2148, %v2150
      %v2152 = vrot.slane %v2144, %v2151
      %v2154 = vunpack.c.l.s4 1934713408
      %v2155 = vunpack.c.0.s8 %v2154
      %v2156 = vlaneseq
      %v2157 = vshrl.u32 %v2156, 7
      %v2158 = vsub.s32 %v2155, %v2157
      %v2159 = vrot.slane %v2145, %v2158
      %v2160 = vcombine.low %v2127, %v2143
      %v2161 = vcombine.high %v2127, %v2143
      %v2163 = vunpack.c.l.s4 1934713408
      %v2164 = vunpack.c.0.s8 %v2163
      %v2165 = vlaneseq
      %v2166 = vshrl.u32 %v2165, 7
      %v2167 = vsub.s32 %v2164, %v2166
      %v2168 = vrot.slane %v2160, %v2167
      %v2170 = vunpack.c.l.s4 1934713408
      %v2171 = vunpack.c.0.s8 %v2170
      %v2172 = vlaneseq
      %v2173 = vshrl.u32 %v2172, 7
      %v2174 = vsub.s32 %v2171, %v2173
      %v2175 = vrot.slane %v2161, %v2174
      %v2176 = vcombine.high %v2152, 0.0
      %v2177 = vcombine.high %v2159, 0.0
      %v2178 = vcombine.high %v2168, 0.0
      %v2179 = vcombine.high %v2175, 0.0
      %v2180 = vcombine.low %v2091, %v2099
      %v2181 = vcombine.high %v2091, %v2099
      %v2183 = vunpack.c.l.s4 1983009808
      %v2184 = vunpack.c.0.s8 %v2183
      %v2185 = vlaneseq
      %v2186 = vshrl.u32 %v2185, 7
      %v2187 = vsub.s32 %v2184, %v2186
      %v2188 = vrot.slane %v2180, %v2187
      %v2190 = vunpack.c.l.s4 1983009808
      %v2191 = vunpack.c.0.s8 %v2190
      %v2192 = vlaneseq
      %v2193 = vshrl.u32 %v2192, 7
      %v2194 = vsub.s32 %v2191, %v2193
      %v2195 = vrot.slane %v2181, %v2194
      %v2196 = vcombine.low %v2095, %v2103
      %v2197 = vcombine.high %v2095, %v2103
      %v2199 = vunpack.c.l.s4 1983009808
      %v2200 = vunpack.c.0.s8 %v2199
      %v2201 = vlaneseq
      %v2202 = vshrl.u32 %v2201, 7
      %v2203 = vsub.s32 %v2200, %v2202
      %v2204 = vrot.slane %v2196, %v2203
      %v2206 = vunpack.c.l.s4 1983009808
      %v2207 = vunpack.c.0.s8 %v2206
      %v2208 = vlaneseq
      %v2209 = vshrl.u32 %v2208, 7
      %v2210 = vsub.s32 %v2207, %v2209
      %v2211 = vrot.slane %v2197, %v2210
      %v2212 = vcombine.low %v2188, %v2204
      %v2213 = vcombine.high %v2188, %v2204
      %v2215 = vunpack.c.l.s4 1934713408
      %v2216 = vunpack.c.0.s8 %v2215
      %v2217 = vlaneseq
      %v2218 = vshrl.u32 %v2217, 7
      %v2219 = vsub.s32 %v2216, %v2218
      %v2220 = vrot.slane %v2212, %v2219
      %v2222 = vunpack.c.l.s4 1934713408
      %v2223 = vunpack.c.0.s8 %v2222
      %v2224 = vlaneseq
      %v2225 = vshrl.u32 %v2224, 7
      %v2226 = vsub.s32 %v2223, %v2225
      %v2227 = vrot.slane %v2213, %v2226
      %v2228 = vcombine.low %v2195, %v2211
      %v2229 = vcombine.high %v2195, %v2211
      %v2231 = vunpack.c.l.s4 1934713408
      %v2232 = vunpack.c.0.s8 %v2231
      %v2233 = vlaneseq
      %v2234 = vshrl.u32 %v2233, 7
      %v2235 = vsub.s32 %v2232, %v2234
      %v2236 = vrot.slane %v2228, %v2235
      %v2238 = vunpack.c.l.s4 1934713408
      %v2239 = vunpack.c.0.s8 %v2238
      %v2240 = vlaneseq
      %v2241 = vshrl.u32 %v2240, 7
      %v2242 = vsub.s32 %v2239, %v2241
      %v2243 = vrot.slane %v2229, %v2242
      %v2244 = vcombine.high %v2220, 0.0
      %v2245 = vcombine.high %v2227, 0.0
      %v2246 = vcombine.high %v2236, 0.0
      %v2247 = vcombine.high %v2243, 0.0
      %2249 = vrot.lane.b32.xlu0 %v2176, 16
      %v2250 = vpop.permute.xlu0 %2249
      %2253 = vrot.lane.b32.xlu0 %v2159, 32
      %v2254 = vpop.permute.xlu0 %2253
      %2257 = vrot.lane.b32.xlu0 %v2177, 48
      %v2258 = vpop.permute.xlu0 %2257
      %2261 = vrot.lane.b32.xlu0 %v2168, 64
      %v2262 = vpop.permute.xlu0 %2261
      %2265 = vrot.lane.b32.xlu0 %v2178, 80
      %v2266 = vpop.permute.xlu0 %2265
      %2269 = vrot.lane.b32.xlu0 %v2175, 96
      %v2270 = vpop.permute.xlu0 %2269
      %2273 = vrot.lane.b32.xlu0 %v2179, 112
      %v2274 = vpop.permute.xlu0 %2273
      %2277 = vrot.lane.b32.xlu0 %v2244, 16
      %v2278 = vpop.permute.xlu0 %2277
      %2281 = vrot.lane.b32.xlu0 %v2227, 32
      %v2282 = vpop.permute.xlu0 %2281
      %2285 = vrot.lane.b32.xlu0 %v2245, 48
      %v2286 = vpop.permute.xlu0 %2285
      %2289 = vrot.lane.b32.xlu0 %v2236, 64
      %v2290 = vpop.permute.xlu0 %2289
      %2293 = vrot.lane.b32.xlu0 %v2246, 80
      %v2294 = vpop.permute.xlu0 %2293
      %2297 = vrot.lane.b32.xlu0 %v2243, 96
      %v2298 = vpop.permute.xlu0 %2297
      %2301 = vrot.lane.b32.xlu0 %v2247, 112
      %v2302 = vpop.permute.xlu0 %2301
      %v2304 = vsel %vm465, %v2152, %v2250
      %v2305 = vsel %vm467, %v2304, %v2254
      %v2306 = vsel %vm469, %v2305, %v2258
      %v2307 = vsel %vm471, %v2306, %v2262
      %v2308 = vsel %vm473, %v2307, %v2266
      %v2309 = vsel %vm475, %v2308, %v2270
      %v2310 = vsel %vm477, %v2309, %v2274
      %v2311 = vsel %vm465, %v2220, %v2278
      %v2312 = vsel %vm467, %v2311, %v2282
      %v2313 = vsel %vm469, %v2312, %v2286
      %v2314 = vsel %vm471, %v2313, %v2290
      %v2315 = vsel %vm473, %v2314, %v2294
      %v2316 = vsel %vm475, %v2315, %v2298
      %v2317 = vsel %vm477, %v2316, %v2302
      %v2320 = vrot.slane %v716, 4
      %v2321 = vrot.slane %v723, 4
      %v2326 = vrot.slane %v1160, 4
      %v2327 = vrot.slane %v1167, 4
      %v2332 = vrot.slane %v1628, 4
      %v2333 = vrot.slane %v1635, 4
      %v2338 = vrot.slane %v2080, 4
      %v2339 = vrot.slane %v2087, 4
      %vm2342 = vcmask 1043456
      %v2343 = vsel %vm2342, %v478, %v2320
      %v2344 = vsel %vm2342, %v485, %v2321
      %v2345 = vsel %vm2342, %v946, %v2326
      %v2346 = vsel %vm2342, %v953, %v2327
      %v2347 = vsel %vm2342, %v1398, %v2332
      %v2348 = vsel %vm2342, %v1405, %v2333
      %v2349 = vsel %vm2342, %v1842, %v2338
      %v2350 = vsel %vm2342, %v1849, %v2339
      %v2351 = vld [vmem:[%s1] sm:$0xff]
      %v2352 = vld [vmem:[%s1 + $0x8] sm:$0xff]
      %vm2353 = vcmask 293888
      %v2355 = vsel %vm2353, %v2351, 0
      %v2358 = vsel %vm2353, %v2352, 0
      %v2361 = vsel %vm2342, %v2310, 0
      %v2364 = vsel %vm2342, %v2317, 0
      %2366 = vmatprep.subr.mxu0 %v2344
      %2367 = vmatpush1.msra.mxu0 %v2343
      %2368 = vmatprep.subr.mxu0 %v2346
      %2369 = vmatpush1.msra.mxu0 %v2345
      %2370 = vmatprep.subr.mxu0 %v2348
      %2371 = vmatpush1.msra.mxu0 %v2347
      %2372 = vmatprep.subr.mxu0 %v2350
      %2373 = vmatpush1.msra.mxu0 %v2349
      %2374 = vmatprep.subr.mxu0 %v2364
      %2375 = vmatpush1.msra.mxu0 %v2361
      %2376 = vmatprep.subr.mxu0 0.0
      %2377 = vmatpush1.msra.mxu0 0.0
      %2378 = vmatprep.subr.mxu0 0.0
      %2379 = vmatpush1.msra.mxu0 0.0
      %2380 = vmatprep.subr.mxu0 0.0
      %2381 = vmatpush1.msra.mxu0 0.0
      %2382 = vmatprep.subr.mxu0 0.0
      %2383 = vmatpush1.msra.mxu0 0.0
      %2384 = vmatprep.subr.mxu0 0.0
      %2385 = vmatpush1.msra.mxu0 0.0
      %2386 = vmatprep.subr.mxu0 0.0
      %2387 = vmatpush1.msra.mxu0 0.0
      %2388 = vmatprep.subr.mxu0 0.0
      %2389 = vmatpush1.msra.mxu0 0.0
      %2390 = vmatprep.subr.mxu0 0.0
      %2391 = vmatpush1.msra.mxu0 0.0
      %2392 = vmatprep.subr.mxu0 0.0
      %2393 = vmatpush1.msra.mxu0 0.0
      %2394 = vmatprep.subr.mxu0 0.0
      %2395 = vmatpush1.msra.mxu0 0.0
      %2396 = vmatprep.subr.mxu0 0.0
      %2397 = vmatpush1.msra.mxu0 0.0
      %2398 = vmatprep.subr.mxu0 0.0
      %2399 = vmatpush1.msra.mxu0 0.0
      %2400 = vmatprep.subr.mxu0 0.0
      %2401 = vmatpush1.msra.mxu0 0.0
      %2402 = vmatprep.subr.mxu0 0.0
      %2403 = vmatpush1.msra.mxu0 0.0
      %2404 = vmatprep.subr.mxu0 0.0
      %2405 = vmatpush1.msra.mxu0 0.0
      %2406 = vmatprep.subr.mxu0 0.0
      %2407 = vmatpush1.msra.mxu0 0.0
      %2408 = vmatprep.subr.mxu0 0.0
      %2409 = vmatpush1.msra.mxu0 0.0
      %2410 = vmatprep.subr.mxu0 0.0
      %2411 = vmatpush1.msra.mxu0 0.0
      %2412 = vmatprep.subr.mxu0 0.0
      %2413 = vmatpush1.msra.mxu0 0.0
      %2414 = vmatprep.subr.mxu0 0.0
      %2415 = vmatpush1.msra.mxu0 0.0
      %2416 = vmatprep.subr.mxu0 0.0
      %2417 = vmatpush1.msra.mxu0 0.0
      %2418 = vmatprep.subr.mxu0 0.0
      %2419 = vmatpush1.msra.mxu0 0.0
      %2420 = vmatprep.subr.mxu0 0.0
      %2421 = vmatpush1.msra.mxu0 0.0
      %2422 = vmatprep.subr.mxu0 0.0
      %2423 = vmatpush1.msra.mxu0 0.0
      %2424 = vmatprep.subr.mxu0 0.0
      %2425 = vmatpush1.msra.mxu0 0.0
      %2426 = vmatprep.subr.mxu0 0.0
      %2427 = vmatpush1.msra.mxu0 0.0
      %2428 = vmatprep.subr.mxu0 0.0
      %2429 = vmatpush1.msra.mxu0 0.0
      %2430 = vmatprep.mubr.f32.mxu0 0.0
      %2431 = vmatmul.mubr.f32.gmra.mrb[0].mxu0 %v2355
      %v2432 = vpop.f32.mrb[0].mxu0
      %v2433 = vadd.f32 0.0, %v2432
      %v2434 = vpop.f32.mrb[0].mxu0
      %v2435 = vadd.f32 0.0, %v2434
      %2436 = vmatprep.mubr.f32.mxu0 0.0
      %2437 = vmatmul.mubr.f32.gmra.mrb[0].mxu0 %v2358
      %v2438 = vpop.f32.mrb[0].mxu0
      %v2439 = vadd.f32 0.0, %v2438
      %v2440 = vpop.f32.mrb[0].mxu0
      %v2441 = vadd.f32 0.0, %v2440
      %2442 = vdwg.mxu0
      %2443 = vst [vmem:[%s192] sm:$0xff] %v2433
      %2444 = vst [vmem:[%s192 + $0x8] sm:$0xff] %v2435
      %2445 = vst [vmem:[%s192 + $0x10] sm:$0xff] %v2439
      %2446 = vst [vmem:[%s192 + $0x18] sm:$0xff] %v2441
      %v2447 = vld [vmem:[%s3] sm:$0xff]
      %v2448 = vld [vmem:[%s3 + $0x8] sm:$0xff]
      %v2449 = vadd.f32 %v2433, %v2435
      %2450 = vadd.xlane.f32.xlu0 %v2449
      %v2451 = vpop.xlane.xlu0 %2450
      %v2452 = vadd.f32 %v2439, %v2441
      %2453 = vadd.xlane.f32.xlu0 %v2452
      %v2454 = vpop.xlane.xlu0 %2453
      %v2455 = vadd.f32 %v2447, %v2451
      %v2456 = vadd.f32 %v2448, %v2454
      %vm2457 = vcmask 7168
      %2458 = vst.msk [vmem:[%s3] sm:$0xff] %vm2457, %v2455
      %2459 = vst.msk [vmem:[%s3 + $0x8] sm:$0xff] %vm2457, %v2456
      %v2460 = vld [vmem:[%s4] sm:$0xff]
      %v2461 = vld [vmem:[%s4 + $0x8] sm:$0xff]
      %v2462 = vmul.f32 %v2433, %v2433
      %v2463 = vmul.f32 %v2435, %v2435
      %v2464 = vmul.f32 %v2439, %v2439
      %v2465 = vmul.f32 %v2441, %v2441
      %v2466 = vadd.f32 %v2462, %v2463
      %2467 = vadd.xlane.f32.xlu0 %v2466
      %v2468 = vpop.xlane.xlu0 %2467
      %v2469 = vadd.f32 %v2464, %v2465
      %2470 = vadd.xlane.f32.xlu0 %v2469
      %v2471 = vpop.xlane.xlu0 %2470
      %v2472 = vadd.f32 %v2460, %v2468
      %v2473 = vadd.f32 %v2461, %v2471
      %2474 = vst.msk [vmem:[%s4] sm:$0xff] %vm2457, %v2472
      %2475 = vst.msk [vmem:[%s4 + $0x8] sm:$0xff] %vm2457, %v2473
      %p2476 = scmp.lt.s32.totalorder %s16, 1
      %s2477 = scalar_select %p2476, %s16, 1
      %s2478 = smul.addr %s2477, 4
      %s2479 = smul.addr %s2478, 8
      %s2480 = scalar_lea.vmem %s2, %s2479
      // Predicated region
      $region33: #{simple_block_forward.2} parent=27 // pred_check
        %p2481 = pneg %p81
      $region34: #{simple_block_forward.2} parent=27 // pred_check_branch
        %2483 = sbr.rel (%p2481) target = $region36
      $region35: #{simple_block_forward.2} parent=27 // pred_region
        _
      $region36: #{simple_block_forward.2} parent=27 // pred_fallthru
        _
      // Predicated region
      $region37: #{simple_block_forward.2} parent=27 // pred_check
        %p2484 = pneg %p102
      $region38: #{simple_block_forward.2} parent=27 // pred_check_branch
        %2486 = sbr.rel (%p2484) target = $region40
      $region39: #{simple_block_forward.2} parent=27 // pred_region
        _
      $region40: #{simple_block_forward.2} parent=27 // pred_fallthru
        _
      // Predicated region
      $region41: #{simple_block_forward.2} parent=27 // pred_check
        %p2487 = pneg %p123
      $region42: #{simple_block_forward.2} parent=27 // pred_check_branch
        %2489 = sbr.rel (%p2487) target = $region44
      $region43: #{simple_block_forward.2} parent=27 // pred_region
        _
      $region44: #{simple_block_forward.2} parent=27 // pred_fallthru
        _
      // Predicated region
      $region45: #{simple_block_forward.2} parent=27 // pred_check
        %p2490 = pneg %p102
      $region46: #{simple_block_forward.2} parent=27 // pred_check_branch
        %2492 = sbr.rel (%p2490) target = $region48
      $region47: #{simple_block_forward.2} parent=27 // pred_region
        _
      $region48: #{simple_block_forward.2} parent=27 // pred_fallthru
        _
      // Predicated region
      $region49: #{simple_block_forward.2} parent=27 // pred_check
        %p2493 = pneg %p123
      $region50: #{simple_block_forward.2} parent=27 // pred_check_branch
        %2495 = sbr.rel (%p2493) target = $region52
      $region51: #{simple_block_forward.2} parent=27 // pred_region
        _
      $region52: #{simple_block_forward.2} parent=27 // pred_fallthru
        _
    $region28: #{simple_block_forward.2} parent=5 // pred_fallthru
      _
    %p2496 = scmp.le.s32.totalorder 2, %s11
    // Predicated region
    $region53: #{simple_block_forward.2} parent=5 // pred_check
      %p2497 = pneg %p2496
    $region54: #{simple_block_forward.2} parent=5 // pred_check_branch
      %2499 = sbr.rel (%p2497) target = $region56
    $region55: #{simple_block_forward.2} parent=5 // pred_region
      %s2500 = ssub.s32 %s11, 2
      // Predicated region
      $region57: #{simple_block_forward.2} parent=55 // pred_check
        %p2501 = pneg %p87
      $region58: #{simple_block_forward.2} parent=55 // pred_check_branch
        %2503 = sbr.rel (%p2501) target = $region60
      $region59: #{simple_block_forward.2} parent=55 // pred_region
        %p2504 = scmp.lt.s32.totalorder %s17, 1
        %s2505 = scalar_select %p2504, %s17, 1
        %s2506 = smul.addr %s2505, 4
        %s2507 = smul.addr %s2506, 8
        %s2508 = scalar_lea.vmem %s2, %s2507
      $region60: #{simple_block_forward.2} parent=55 // pred_fallthru
        _
    $region56: #{simple_block_forward.2} parent=5 // pred_fallthru
      _
  $region6: #{simple_block_forward.2} parent=0 // loop_footer
    %s15 = sadd.s32 1, %s11
  $region7: #{simple_block_forward.2} parent=0 // loop_footer_branch
    %10 = sbr.rel target = $region3
  $region8: #{simple_block_forward.2} parent=0 // loop_exit
    _

</llo_original>
